<compile_context>
chip_gen: v7x
topology: tpu7x:2x2x1
jax: 0.10.0
libtpu: 0.0.40
codegen_flags: <defaults>
</compile_context>

<pallas_src>
import functools

import jax
import jax.numpy as jnp
from jax import lax
from jax.experimental import pallas as pl
from jax.experimental.pallas import tpu as pltpu


# Conservative scoped-VMEM limit that is valid on v5e/v6e/v7x.
_VMEM_LIMIT = 32 * 1024 * 1024


def _round_up(x, m):
    return (x + m - 1) // m * m


def _pick_seq_tile(n, target):
    """Largest tile <= target that divides n (sublane-aligned when tiled)."""
    if n <= target:
        return n
    for t in range(target, 7, -1):
        if n % t == 0 and t % 8 == 0:
            return t
    return n


# --------------------- tiled, pipelined bf16 matmul (MXU) -------------------

def _matmul_kernel(x_ref, w_ref, o_ref, acc_ref):
    @pl.when(pl.program_id(2) == 0)
    def _():
        acc_ref[...] = jnp.zeros_like(acc_ref)

    acc_ref[...] += jnp.dot(x_ref[...], w_ref[...],
                            preferred_element_type=jnp.float32)

    @pl.when(pl.program_id(2) == pl.num_programs(2) - 1)
    def _():
        o_ref[...] = acc_ref[...].astype(o_ref.dtype)


def matmul_pallas(x, w, *, out_dtype=jnp.float32, tm=256, tn=256, tk=512):
    """x:(M,K) @ w:(K,N) -> (M,N).  bf16 MXU matmul, f32 accumulation.

    Inputs are zero-padded up to tile multiples (safe for matmul) and the
    result is sliced back; tiles are double-buffered by the BlockSpec pipeline.
    """
    x = x.astype(jnp.bfloat16)
    w = w.astype(jnp.bfloat16)
    M, K = x.shape
    K2, N = w.shape
    assert K == K2
    tm = min(tm, _round_up(M, 8))
    tn = min(tn, _round_up(N, 128))
    tk = min(tk, _round_up(K, 128))
    Mp, Np, Kp = _round_up(M, tm), _round_up(N, tn), _round_up(K, tk)
    if (Mp, Kp) != (M, K):
        x = jnp.pad(x, ((0, Mp - M), (0, Kp - K)))
    if (Kp, Np) != (K, N):
        w = jnp.pad(w, ((0, Kp - K), (0, Np - N)))

    out = pl.pallas_call(
        _matmul_kernel,
        out_shape=jax.ShapeDtypeStruct((Mp, Np), out_dtype),
        grid_spec=pltpu.PrefetchScalarGridSpec(
            num_scalar_prefetch=0,
            grid=(Mp // tm, Np // tn, Kp // tk),
            in_specs=[pl.BlockSpec((tm, tk), lambda i, j, k: (i, k)),
                      pl.BlockSpec((tk, tn), lambda i, j, k: (k, j))],
            out_specs=pl.BlockSpec((tm, tn), lambda i, j, k: (i, j)),
            scratch_shapes=[pltpu.VMEM((tm, tn), jnp.float32)]),
        compiler_params=pltpu.CompilerParams(
            dimension_semantics=("parallel", "parallel", "arbitrary"),
            vmem_limit_bytes=_VMEM_LIMIT),
    )(x, w)
    if (Mp, Np) != (M, N):
        out = out[:M, :N]
    return out


# -------------------- flash-style GQA attention kernel ----------------------

def _flash_attn_kernel(q_ref, k_ref, v_ref, o_ref, m_ref, l_ref, acc_ref, *,
                       scale):
    # q_ref : (1, tq, Hq,  Dh)  bf16
    # k_ref : (1, tk, Hkv, Dh)  bf16
    # v_ref : (1, tk, Hkv, Dh)  bf16
    # o_ref : (1, tq, Hq*Dh)    bf16   (lane-dense output)
    # scratch (f32): m_ref/l_ref (Hq, tq, 1), acc_ref (Hq, tq, Dh)
    Hq = q_ref.shape[2]
    Hkv = k_ref.shape[2]
    repeats = Hq // Hkv
    kv_i = pl.program_id(2)

    @pl.when(kv_i == 0)
    def _():
        m_ref[...] = jnp.full_like(m_ref, -jnp.inf)
        l_ref[...] = jnp.zeros_like(l_ref)
        acc_ref[...] = jnp.zeros_like(acc_ref)

    q = q_ref[0]   # (tq, Hq, Dh)
    k = k_ref[0]   # (tk, Hkv, Dh)
    v = v_ref[0]   # (tk, Hkv, Dh)

    # GQA: each KV head is loaded once and reused for `repeats` query heads.
    for g in range(Hkv):
        kh = k[:, g, :]                                       # (tk, Dh)
        vh = v[:, g, :]                                       # (tk, Dh)
        for r in range(repeats):
            h = g * repeats + r
            qh = q[:, h, :]                                   # (tq, Dh)
            # q @ k^T via last-dim contraction (no transpose on the MXU path).
            s = lax.dot_general(
                qh, kh, (((1,), (1,)), ((), ())),
                preferred_element_type=jnp.float32) * scale   # (tq, tk) f32
            m_prev = m_ref[h]                                 # (tq, 1)
            m_new = jnp.maximum(m_prev, jnp.max(s, axis=-1, keepdims=True))
            alpha = jnp.exp(m_prev - m_new)                   # (tq, 1)
            p = jnp.exp(s - m_new)                            # (tq, tk) f32
            l_ref[h] = alpha * l_ref[h] + jnp.sum(p, axis=-1, keepdims=True)
            acc_ref[h] = alpha * acc_ref[h] + lax.dot_general(
                p.astype(vh.dtype), vh, (((1,), (0,)), ((), ())),
                preferred_element_type=jnp.float32)
            m_ref[h] = m_new

    @pl.when(kv_i == pl.num_programs(2) - 1)
    def _():
        outs = []
        for h in range(Hq):
            inv = pl.reciprocal(l_ref[h], approx=True)        # (tq, 1)
            outs.append((acc_ref[h] * inv).astype(o_ref.dtype))
        # Lane-dense (tq, Hq*Dh) slab, matching the wo-projection layout.
        o_ref[0] = jnp.concatenate(outs, axis=-1)


def flash_attention_pallas(q, k, v, scale, *, tq_target=128, tk_target=256):
    """q:(B,L,Hq,Dh), k/v:(B,L,Hkv,Dh) -> (B,L,Hq*Dh).  No mask (cache=None)."""
    B, L, Hq, Dh = q.shape
    _, _, Hkv, _ = k.shape
    tq = _pick_seq_tile(L, tq_target)
    tk = _pick_seq_tile(L, tk_target)
    kernel = functools.partial(_flash_attn_kernel, scale=scale)
    return pl.pallas_call(
        kernel,
        out_shape=jax.ShapeDtypeStruct((B, L, Hq * Dh), jnp.bfloat16),
        grid_spec=pltpu.PrefetchScalarGridSpec(
            num_scalar_prefetch=0,
            grid=(B, L // tq, L // tk),
            in_specs=[
                pl.BlockSpec((1, tq, Hq, Dh), lambda b, qi, ki: (b, qi, 0, 0)),
                pl.BlockSpec((1, tk, Hkv, Dh), lambda b, qi, ki: (b, ki, 0, 0)),
                pl.BlockSpec((1, tk, Hkv, Dh), lambda b, qi, ki: (b, ki, 0, 0)),
            ],
            out_specs=pl.BlockSpec((1, tq, Hq * Dh),
                                   lambda b, qi, ki: (b, qi, 0)),
            scratch_shapes=[
                pltpu.VMEM((Hq, tq, 1), jnp.float32),    # running max  m
                pltpu.VMEM((Hq, tq, 1), jnp.float32),    # running sum  l
                pltpu.VMEM((Hq, tq, Dh), jnp.float32),   # accumulator
            ]),
        compiler_params=pltpu.CompilerParams(
            dimension_semantics=("parallel", "parallel", "arbitrary"),
            vmem_limit_bytes=_VMEM_LIMIT),
    )(q, k, v)


# ------------------------------ JAX glue ------------------------------------

def apply_rotary_emb(x, cos, sin):
    """Interleaved-pair RoPE (torch view_as_complex semantics), f32 math.

    x: (B, L, H, Dh)  (any float dtype), cos/sin: (L, Dh//2) f32.
    Returns bf16 for the attention kernel.
    """
    B, L, H, Dh = x.shape
    xf = x.astype(jnp.float32).reshape(B, L, H, Dh // 2, 2)
    xe, xo = xf[..., 0], xf[..., 1]
    c = cos[None, :, None, :]
    s = sin[None, :, None, :]
    oe = xe * c - xo * s
    oo = xe * s + xo * c
    out = jnp.stack([oe, oo], axis=-1).reshape(B, L, H, Dh)
    return out.astype(jnp.bfloat16)


def attention_forward(x, freqs_cos, freqs_sin, params, args):
    """Equivalent of Attention.forward(x, freqs_cis, cache=None)."""
    Hq = args["n_heads"]
    Hkv = args["n_kv_heads"]
    Dh = args["head_dim"]
    dim = args["dim"]
    scale = Dh ** (-0.5)

    B, S, K, D = x.shape
    assert D == dim
    L = S * K

    # Fused QKV projection: one bf16 MXU matmul instead of three.
    x2d = x.reshape(B * L, dim)
    qkv = matmul_pallas(x2d, params["w_qkv"], out_dtype=jnp.bfloat16)
    nq, nk = Hq * Dh, Hkv * Dh
    xq = qkv[:, :nq].reshape(B, L, Hq, Dh)
    xk = qkv[:, nq:nq + nk].reshape(B, L, Hkv, Dh)
    xv = qkv[:, nq + nk:].reshape(B, L, Hkv, Dh)

    fc = freqs_cos.reshape(L, Dh // 2)
    fs = freqs_sin.reshape(L, Dh // 2)
    xq = apply_rotary_emb(xq, fc, fs)
    xk = apply_rotary_emb(xk, fc, fs)

    # Flash attention; output already in the lane-dense (B, L, Hq*Dh) layout
    # required by wo — no transposes between kernels.
    attn = flash_attention_pallas(xq, xk, xv, scale)
    out = matmul_pallas(attn.reshape(B * L, Hq * Dh), params["wo"],
                        out_dtype=jnp.float32)
    return out.reshape(B, S, K, dim)


def init_params(key, args):
    """Bias-free Linear weights stored transposed as (in, out); wq|wk|wv fused."""
    dim = args["dim"]
    Hq = args["n_heads"]
    Hkv = args["n_kv_heads"]
    Dh = args["head_dim"]
    k1, k2, k3, k4 = jax.random.split(key, 4)
    s = 0.05
    wq = s * jax.random.normal(k1, (dim, Hq * Dh), jnp.float32)
    wk = s * jax.random.normal(k2, (dim, Hkv * Dh), jnp.float32)
    wv = s * jax.random.normal(k3, (dim, Hkv * Dh), jnp.float32)
    wo = s * jax.random.normal(k4, (Hq * Dh, dim), jnp.float32)
    return {
        "w_qkv": jnp.concatenate([wq, wk, wv], axis=1).astype(jnp.bfloat16),
        "wo": wo.astype(jnp.bfloat16),
    }


# -------------------------------- main --------------------------------------

if __name__ == "__main__":
    args = dict(dim=32, n_heads=4, n_kv_heads=2, head_dim=16)

    B, S, K = 2, 3, 4                     # batch, seqlen_sum, num_keypoints
    key = jax.random.PRNGKey(0)
    kx, kp = jax.random.split(key)

    x = jax.random.normal(kx, (B, S, K, args["dim"]), jnp.float32)
    params = init_params(kp, args)

    # freqs_cis equivalent: per (seq, keypoint) position rotary phases.
    Dh2 = args["head_dim"] // 2
    pos = jnp.arange(S * K, dtype=jnp.float32).reshape(S, K)
    inv_freq = 1.0 / (10000.0 ** (jnp.arange(Dh2, dtype=jnp.float32) / Dh2))
    phase = pos[..., None] * inv_freq[None, None, :]          # (S, K, Dh/2)
    freqs_cos = jnp.cos(phase)
    freqs_sin = jnp.sin(phase)

    fwd = jax.jit(functools.partial(attention_forward, args=args))
    out = fwd(x, freqs_cos, freqs_sin, params)
    out = jax.block_until_ready(out)
    assert out.shape == (B, S, K, args["dim"])
    assert bool(jnp.all(jnp.isfinite(out)))
    print("KERNEL_OK")
</pallas_src>

<mosaic_0001>
module attributes {stable_mosaic.version = 11 : i64} {
  func.func @_matmul_kernel(%arg0: i32, %arg1: i32, %arg2: i32, %arg3: memref<24x128xbf16, #tpu.memory_space<vmem>>, %arg4: memref<128x128xbf16, #tpu.memory_space<vmem>>, %arg5: memref<24x128xbf16, #tpu.memory_space<vmem>>, %arg6: memref<24x128xf32, #tpu.memory_space<vmem>>) attributes {dimension_semantics = [#tpu.dimension_semantics<parallel>, #tpu.dimension_semantics<parallel>, #tpu.dimension_semantics<arbitrary>], iteration_bounds = array<i64: 1, 1, 1>, scalar_prefetch = 0 : i64, scratch_operands = 1 : i64, tpu.core_type = #tpu.core_type<tc>, window_params = [{transform_indices = @transform_0, window_bounds = array<i64: 24, 128>}, {transform_indices = @transform_1, window_bounds = array<i64: 128, 128>}, {transform_indices = @transform_2, window_bounds = array<i64: 24, 128>}]} {
    %c0_i32 = arith.constant 0 : i32
    %0 = arith.cmpi eq, %arg2, %c0_i32 : i32
    %1 = arith.extui %0 : i1 to i32
    %c0_i32_0 = arith.constant 0 : i32
    %2 = arith.cmpi ne, %1, %c0_i32_0 : i32
    scf.if %2 {
      %cst_10 = arith.constant 0.000000e+00 : f32
      %12 = vector.broadcast %cst_10 : f32 to vector<24x128xf32>
      %c0_11 = arith.constant 0 : index
      %c0_12 = arith.constant 0 : index
      %13 = vector.load %arg6[%c0_11, %c0_12] : memref<24x128xf32, #tpu.memory_space<vmem>>, vector<24x128xf32>
      tpu.vector_store %arg6[%c0_11, %c0_12], %12 {strides = array<i32>} : memref<24x128xf32, #tpu.memory_space<vmem>>, vector<24x128xf32>,
    } else {
    }
    %c0 = arith.constant 0 : index
    %c0_1 = arith.constant 0 : index
    %3 = vector.load %arg6[%c0, %c0_1] : memref<24x128xf32, #tpu.memory_space<vmem>>, vector<24x128xf32>
    %c0_2 = arith.constant 0 : index
    %c0_3 = arith.constant 0 : index
    %4 = vector.load %arg3[%c0_2, %c0_3] : memref<24x128xbf16, #tpu.memory_space<vmem>>, vector<24x128xbf16>
    %c0_4 = arith.constant 0 : index
    %c0_5 = arith.constant 0 : index
    %5 = vector.load %arg4[%c0_4, %c0_5] : memref<128x128xbf16, #tpu.memory_space<vmem>>, vector<128x128xbf16>
    %cst = arith.constant dense<0.000000e+00> : vector<24x128xf32>
    %6 = tpu.matmul %4, %5, %cst {dimension_numbers = #tpu.dot_dimension_numbers<[1], [0], [0], [1], [0, 0, 1, 1], [], []>} : vector<24x128xbf16>, vector<128x128xbf16>, vector<24x128xf32> -> vector<24x128xf32>
    %7 = arith.addf %3, %6 : vector<24x128xf32>
    %c0_6 = arith.constant 0 : index
    %c0_7 = arith.constant 0 : index
    %8 = vector.load %arg6[%c0_6, %c0_7] : memref<24x128xf32, #tpu.memory_space<vmem>>, vector<24x128xf32>
    tpu.vector_store %arg6[%c0_6, %c0_7], %7 {strides = array<i32>} : memref<24x128xf32, #tpu.memory_space<vmem>>, vector<24x128xf32>,
    %c0_i32_8 = arith.constant 0 : i32
    %9 = arith.cmpi eq, %arg2, %c0_i32_8 : i32
    %10 = arith.extui %9 : i1 to i32
    %c0_i32_9 = arith.constant 0 : i32
    %11 = arith.cmpi ne, %10, %c0_i32_9 : i32
    scf.if %11 {
      %c0_10 = arith.constant 0 : index
      %c0_11 = arith.constant 0 : index
      %12 = vector.load %arg6[%c0_10, %c0_11] : memref<24x128xf32, #tpu.memory_space<vmem>>, vector<24x128xf32>
      %13 = arith.truncf %12 : vector<24x128xf32> to vector<24x128xbf16>
      %c0_12 = arith.constant 0 : index
      %c0_13 = arith.constant 0 : index
      %14 = vector.load %arg5[%c0_12, %c0_13] : memref<24x128xbf16, #tpu.memory_space<vmem>>, vector<24x128xbf16>
      tpu.vector_store %arg5[%c0_12, %c0_13], %13 {strides = array<i32>} : memref<24x128xbf16, #tpu.memory_space<vmem>>, vector<24x128xbf16>,
    } else {
    }
    return
  }
  func.func @transform_0(%arg0: i32, %arg1: i32, %arg2: i32) -> (i32, i32) {
    %c0_i32 = arith.constant 0 : i32
    return %arg0, %arg2 : i32, i32
  }
  func.func @transform_1(%arg0: i32, %arg1: i32, %arg2: i32) -> (i32, i32) {
    %c0_i32 = arith.constant 0 : i32
    return %arg2, %arg1 : i32, i32
  }
  func.func @transform_2(%arg0: i32, %arg1: i32, %arg2: i32) -> (i32, i32) {
    %c0_i32 = arith.constant 0 : i32
    return %arg0, %arg1 : i32, i32
  }
}

module attributes {stable_mosaic.version = 11 : i64} {
  func.func @_flash_attn_kernel(%arg0: i32, %arg1: i32, %arg2: i32, %arg3: memref<1x12x4x16xbf16, #tpu.memory_space<vmem>>, %arg4: memref<1x12x2x16xbf16, #tpu.memory_space<vmem>>, %arg5: memref<1x12x2x16xbf16, #tpu.memory_space<vmem>>, %arg6: memref<1x12x64xbf16, #tpu.memory_space<vmem>>, %arg7: memref<4x12x1xf32, #tpu.memory_space<vmem>>, %arg8: memref<4x12x1xf32, #tpu.memory_space<vmem>>, %arg9: memref<4x12x16xf32, #tpu.memory_space<vmem>>) attributes {dimension_semantics = [#tpu.dimension_semantics<parallel>, #tpu.dimension_semantics<parallel>, #tpu.dimension_semantics<arbitrary>], iteration_bounds = array<i64: 2, 1, 1>, scalar_prefetch = 0 : i64, scratch_operands = 3 : i64, tpu.core_type = #tpu.core_type<tc>, window_params = [{transform_indices = @transform_0, window_bounds = array<i64: 1, 12, 4, 16>}, {transform_indices = @transform_1, window_bounds = array<i64: 1, 12, 2, 16>}, {transform_indices = @transform_2, window_bounds = array<i64: 1, 12, 2, 16>}, {transform_indices = @transform_3, window_bounds = array<i64: 1, 12, 64>}]} {
    %c0_i32 = arith.constant 0 : i32
    %0 = arith.cmpi eq, %arg2, %c0_i32 : i32
    %1 = arith.extui %0 : i1 to i32
    %c0_i32_0 = arith.constant 0 : i32
    %2 = arith.cmpi ne, %1, %c0_i32_0 : i32
    scf.if %2 {
      %cst_102 = arith.constant 0xFF800000 : f32
      %168 = vector.broadcast %cst_102 : f32 to vector<4x12x1xf32>
      %c0_103 = arith.constant 0 : index
      %c0_104 = arith.constant 0 : index
      %c0_105 = arith.constant 0 : index
      %169 = vector.load %arg7[%c0_103, %c0_104, %c0_105] : memref<4x12x1xf32, #tpu.memory_space<vmem>>, vector<4x12x1xf32>
      tpu.vector_store %arg7[%c0_103, %c0_104, %c0_105], %168 {strides = array<i32>} : memref<4x12x1xf32, #tpu.memory_space<vmem>>, vector<4x12x1xf32>,
      %cst_106 = arith.constant 0.000000e+00 : f32
      %170 = vector.broadcast %cst_106 : f32 to vector<4x12x1xf32>
      %c0_107 = arith.constant 0 : index
      %c0_108 = arith.constant 0 : index
      %c0_109 = arith.constant 0 : index
      %171 = vector.load %arg8[%c0_107, %c0_108, %c0_109] : memref<4x12x1xf32, #tpu.memory_space<vmem>>, vector<4x12x1xf32>
      tpu.vector_store %arg8[%c0_107, %c0_108, %c0_109], %170 {strides = array<i32>} : memref<4x12x1xf32, #tpu.memory_space<vmem>>, vector<4x12x1xf32>,
      %cst_110 = arith.constant 0.000000e+00 : f32
      %172 = vector.broadcast %cst_110 : f32 to vector<4x12x16xf32>
      %c0_111 = arith.constant 0 : index
      %c0_112 = arith.constant 0 : index
      %c0_113 = arith.constant 0 : index
      %173 = vector.load %arg9[%c0_111, %c0_112, %c0_113] : memref<4x12x16xf32, #tpu.memory_space<vmem>>, vector<4x12x16xf32>
      tpu.vector_store %arg9[%c0_111, %c0_112, %c0_113], %172 {strides = array<i32>} : memref<4x12x16xf32, #tpu.memory_space<vmem>>, vector<4x12x16xf32>,
    } else {
    }
    %c0 = arith.constant 0 : index
    %c0_1 = arith.constant 0 : index
    %c0_2 = arith.constant 0 : index
    %c0_3 = arith.constant 0 : index
    %3 = vector.load %arg3[%c0, %c0_1, %c0_2, %c0_3] : memref<1x12x4x16xbf16, #tpu.memory_space<vmem>>, vector<1x12x4x16xbf16>
    %4 = vector.shape_cast %3 : vector<1x12x4x16xbf16> to vector<12x4x16xbf16>
    %c0_4 = arith.constant 0 : index
    %c0_5 = arith.constant 0 : index
    %c0_6 = arith.constant 0 : index
    %c0_7 = arith.constant 0 : index
    %5 = vector.load %arg4[%c0_4, %c0_5, %c0_6, %c0_7] : memref<1x12x2x16xbf16, #tpu.memory_space<vmem>>, vector<1x12x2x16xbf16>
    %6 = vector.shape_cast %5 : vector<1x12x2x16xbf16> to vector<12x2x16xbf16>
    %c0_8 = arith.constant 0 : index
    %c0_9 = arith.constant 0 : index
    %c0_10 = arith.constant 0 : index
    %c0_11 = arith.constant 0 : index
    %7 = vector.load %arg5[%c0_8, %c0_9, %c0_10, %c0_11] : memref<1x12x2x16xbf16, #tpu.memory_space<vmem>>, vector<1x12x2x16xbf16>
    %8 = vector.shape_cast %7 : vector<1x12x2x16xbf16> to vector<12x2x16xbf16>
    %9 = vector.extract_strided_slice %6 {offsets = [0, 0, 0], sizes = [12, 1, 16], strides = [1, 1, 1]} : vector<12x2x16xbf16> to vector<12x1x16xbf16>
    %10 = vector.shape_cast %9 : vector<12x1x16xbf16> to vector<12x16xbf16>
    %11 = vector.extract_strided_slice %8 {offsets = [0, 0, 0], sizes = [12, 1, 16], strides = [1, 1, 1]} : vector<12x2x16xbf16> to vector<12x1x16xbf16>
    %12 = vector.shape_cast %11 : vector<12x1x16xbf16> to vector<12x16xbf16>
    %13 = vector.extract_strided_slice %4 {offsets = [0, 0, 0], sizes = [12, 1, 16], strides = [1, 1, 1]} : vector<12x4x16xbf16> to vector<12x1x16xbf16>
    %14 = vector.shape_cast %13 : vector<12x1x16xbf16> to vector<12x16xbf16>
    %cst = arith.constant dense<0.000000e+00> : vector<12x12xf32>
    %15 = tpu.matmul %14, %10, %cst {dimension_numbers = #tpu.dot_dimension_numbers<[1], [1], [0], [0], [0, 0, 1, 0], [], []>} : vector<12x16xbf16>, vector<12x16xbf16>, vector<12x12xf32> -> vector<12x12xf32>
    %cst_12 = arith.constant 2.500000e-01 : f32
    %16 = vector.broadcast %cst_12 : f32 to vector<12x12xf32>
    %17 = arith.mulf %15, %16 : vector<12x12xf32>
    %c0_13 = arith.constant 0 : index
    %c0_14 = arith.constant 0 : index
    %c0_15 = arith.constant 0 : index
    %18 = vector.load %arg7[%c0_13, %c0_14, %c0_15] : memref<4x12x1xf32, #tpu.memory_space<vmem>>, vector<1x12x1xf32>
    %19 = vector.shape_cast %18 : vector<1x12x1xf32> to vector<12x1xf32>
    %cst_16 = arith.constant dense<0xFF800000> : vector<12xf32>
    %20 = vector.multi_reduction <maximumf>, %17, %cst_16 [1] : vector<12x12xf32> to vector<12xf32>
    %21 = vector.shape_cast %20 : vector<12xf32> to vector<12x1xf32>
    %22 = arith.maximumf %19, %21 : vector<12x1xf32>
    %23 = arith.subf %19, %22 : vector<12x1xf32>
    %24 = math.exp %23 : vector<12x1xf32>
    %25 = vector.broadcast %22 : vector<12x1xf32> to vector<12x12xf32>
    %26 = arith.subf %17, %25 : vector<12x12xf32>
    %27 = math.exp %26 : vector<12x12xf32>
    %c0_17 = arith.constant 0 : index
    %c0_18 = arith.constant 0 : index
    %c0_19 = arith.constant 0 : index
    %28 = vector.load %arg8[%c0_17, %c0_18, %c0_19] : memref<4x12x1xf32, #tpu.memory_space<vmem>>, vector<1x12x1xf32>
    %29 = vector.shape_cast %28 : vector<1x12x1xf32> to vector<12x1xf32>
    %30 = arith.mulf %24, %29 : vector<12x1xf32>
    %cst_20 = arith.constant dense<0.000000e+00> : vector<12xf32>
    %31 = vector.multi_reduction <add>, %27, %cst_20 [1] : vector<12x12xf32> to vector<12xf32>
    %32 = vector.shape_cast %31 : vector<12xf32> to vector<12x1xf32>
    %33 = arith.addf %30, %32 : vector<12x1xf32>
    %c0_21 = arith.constant 0 : index
    %c0_22 = arith.constant 0 : index
    %c0_23 = arith.constant 0 : index
    %34 = vector.load %arg8[%c0_21, %c0_22, %c0_23] : memref<4x12x1xf32, #tpu.memory_space<vmem>>, vector<1x12x1xf32>
    %35 = vector.shape_cast %34 : vector<1x12x1xf32> to vector<12x1xf32>
    %36 = vector.shape_cast %33 : vector<12x1xf32> to vector<1x12x1xf32>
    tpu.vector_store %arg8[%c0_21, %c0_22, %c0_23], %36 {strides = array<i32>} : memref<4x12x1xf32, #tpu.memory_space<vmem>>, vector<1x12x1xf32>,
    %c0_24 = arith.constant 0 : index
    %c0_25 = arith.constant 0 : index
    %c0_26 = arith.constant 0 : index
    %37 = vector.load %arg9[%c0_24, %c0_25, %c0_26] : memref<4x12x16xf32, #tpu.memory_space<vmem>>, vector<1x12x16xf32>
    %38 = vector.shape_cast %37 : vector<1x12x16xf32> to vector<12x16xf32>
    %39 = vector.broadcast %24 : vector<12x1xf32> to vector<12x16xf32>
    %40 = arith.mulf %39, %38 : vector<12x16xf32>
    %41 = arith.truncf %27 : vector<12x12xf32> to vector<12x12xbf16>
    %cst_27 = arith.constant dense<0.000000e+00> : vector<12x16xf32>
    %42 = tpu.matmul %41, %12, %cst_27 {dimension_numbers = #tpu.dot_dimension_numbers<[1], [0], [0], [1], [0, 0, 1, 1], [], []>} : vector<12x12xbf16>, vector<12x16xbf16>, vector<12x16xf32> -> vector<12x16xf32>
    %43 = arith.addf %40, %42 : vector<12x16xf32>
    %c0_28 = arith.constant 0 : index
    %c0_29 = arith.constant 0 : index
    %c0_30 = arith.constant 0 : index
    %44 = vector.load %arg9[%c0_28, %c0_29, %c0_30] : memref<4x12x16xf32, #tpu.memory_space<vmem>>, vector<1x12x16xf32>
    %45 = vector.shape_cast %44 : vector<1x12x16xf32> to vector<12x16xf32>
    %46 = vector.shape_cast %43 : vector<12x16xf32> to vector<1x12x16xf32>
    tpu.vector_store %arg9[%c0_28, %c0_29, %c0_30], %46 {strides = array<i32>} : memref<4x12x16xf32, #tpu.memory_space<vmem>>, vector<1x12x16xf32>,
    %c0_31 = arith.constant 0 : index
    %c0_32 = arith.constant 0 : index
    %c0_33 = arith.constant 0 : index
    %47 = vector.load %arg7[%c0_31, %c0_32, %c0_33] : memref<4x12x1xf32, #tpu.memory_space<vmem>>, vector<1x12x1xf32>
    %48 = vector.shape_cast %47 : vector<1x12x1xf32> to vector<12x1xf32>
    %49 = vector.shape_cast %22 : vector<12x1xf32> to vector<1x12x1xf32>
    tpu.vector_store %arg7[%c0_31, %c0_32, %c0_33], %49 {strides = array<i32>} : memref<4x12x1xf32, #tpu.memory_space<vmem>>, vector<1x12x1xf32>,
    %50 = vector.extract_strided_slice %4 {offsets = [0, 1, 0], sizes = [12, 1, 16], strides = [1, 1, 1]} : vector<12x4x16xbf16> to vector<12x1x16xbf16>
    %51 = vector.shape_cast %50 : vector<12x1x16xbf16> to vector<12x16xbf16>
    %cst_34 = arith.constant dense<0.000000e+00> : vector<12x12xf32>
    %52 = tpu.matmul %51, %10, %cst_34 {dimension_numbers = #tpu.dot_dimension_numbers<[1], [1], [0], [0], [0, 0, 1, 0], [], []>} : vector<12x16xbf16>, vector<12x16xbf16>, vector<12x12xf32> -> vector<12x12xf32>
    %cst_35 = arith.constant 2.500000e-01 : f32
    %53 = vector.broadcast %cst_35 : f32 to vector<12x12xf32>
    %54 = arith.mulf %52, %53 : vector<12x12xf32>
    %c1 = arith.constant 1 : index
    %c0_36 = arith.constant 0 : index
    %c0_37 = arith.constant 0 : index
    %55 = vector.load %arg7[%c1, %c0_36, %c0_37] : memref<4x12x1xf32, #tpu.memory_space<vmem>>, vector<1x12x1xf32>
    %56 = vector.shape_cast %55 : vector<1x12x1xf32> to vector<12x1xf32>
    %cst_38 = arith.constant dense<0xFF800000> : vector<12xf32>
    %57 = vector.multi_reduction <maximumf>, %54, %cst_38 [1] : vector<12x12xf32> to vector<12xf32>
    %58 = vector.shape_cast %57 : vector<12xf32> to vector<12x1xf32>
    %59 = arith.maximumf %56, %58 : vector<12x1xf32>
    %60 = arith.subf %56, %59 : vector<12x1xf32>
    %61 = math.exp %60 : vector<12x1xf32>
    %62 = vector.broadcast %59 : vector<12x1xf32> to vector<12x12xf32>
    %63 = arith.subf %54, %62 : vector<12x12xf32>
    %64 = math.exp %63 : vector<12x12xf32>
    %c1_39 = arith.constant 1 : index
    %c0_40 = arith.constant 0 : index
    %c0_41 = arith.constant 0 : index
    %65 = vector.load %arg8[%c1_39, %c0_40, %c0_41] : memref<4x12x1xf32, #tpu.memory_space<vmem>>, vector<1x12x1xf32>
    %66 = vector.shape_cast %65 : vector<1x12x1xf32> to vector<12x1xf32>
    %67 = arith.mulf %61, %66 : vector<12x1xf32>
    %cst_42 = arith.constant dense<0.000000e+00> : vector<12xf32>
    %68 = vector.multi_reduction <add>, %64, %cst_42 [1] : vector<12x12xf32> to vector<12xf32>
    %69 = vector.shape_cast %68 : vector<12xf32> to vector<12x1xf32>
    %70 = arith.addf %67, %69 : vector<12x1xf32>
    %c1_43 = arith.constant 1 : index
    %c0_44 = arith.constant 0 : index
    %c0_45 = arith.constant 0 : index
    %71 = vector.load %arg8[%c1_43, %c0_44, %c0_45] : memref<4x12x1xf32, #tpu.memory_space<vmem>>, vector<1x12x1xf32>
    %72 = vector.shape_cast %71 : vector<1x12x1xf32> to vector<12x1xf32>
    %73 = vector.shape_cast %70 : vector<12x1xf32> to vector<1x12x1xf32>
    tpu.vector_store %arg8[%c1_43, %c0_44, %c0_45], %73 {strides = array<i32>} : memref<4x12x1xf32, #tpu.memory_space<vmem>>, vector<1x12x1xf32>,
    %c1_46 = arith.constant 1 : index
    %c0_47 = arith.constant 0 : index
    %c0_48 = arith.constant 0 : index
    %74 = vector.load %arg9[%c1_46, %c0_47, %c0_48] : memref<4x12x16xf32, #tpu.memory_space<vmem>>, vector<1x12x16xf32>
    %75 = vector.shape_cast %74 : vector<1x12x16xf32> to vector<12x16xf32>
    %76 = vector.broadcast %61 : vector<12x1xf32> to vector<12x16xf32>
    %77 = arith.mulf %76, %75 : vector<12x16xf32>
    %78 = arith.truncf %64 : vector<12x12xf32> to vector<12x12xbf16>
    %cst_49 = arith.constant dense<0.000000e+00> : vector<12x16xf32>
    %79 = tpu.matmul %78, %12, %cst_49 {dimension_numbers = #tpu.dot_dimension_numbers<[1], [0], [0], [1], [0, 0, 1, 1], [], []>} : vector<12x12xbf16>, vector<12x16xbf16>, vector<12x16xf32> -> vector<12x16xf32>
    %80 = arith.addf %77, %79 : vector<12x16xf32>
    %c1_50 = arith.constant 1 : index
    %c0_51 = arith.constant 0 : index
    %c0_52 = arith.constant 0 : index
    %81 = vector.load %arg9[%c1_50, %c0_51, %c0_52] : memref<4x12x16xf32, #tpu.memory_space<vmem>>, vector<1x12x16xf32>
    %82 = vector.shape_cast %81 : vector<1x12x16xf32> to vector<12x16xf32>
    %83 = vector.shape_cast %80 : vector<12x16xf32> to vector<1x12x16xf32>
    tpu.vector_store %arg9[%c1_50, %c0_51, %c0_52], %83 {strides = array<i32>} : memref<4x12x16xf32, #tpu.memory_space<vmem>>, vector<1x12x16xf32>,
    %c1_53 = arith.constant 1 : index
    %c0_54 = arith.constant 0 : index
    %c0_55 = arith.constant 0 : index
    %84 = vector.load %arg7[%c1_53, %c0_54, %c0_55] : memref<4x12x1xf32, #tpu.memory_space<vmem>>, vector<1x12x1xf32>
    %85 = vector.shape_cast %84 : vector<1x12x1xf32> to vector<12x1xf32>
    %86 = vector.shape_cast %59 : vector<12x1xf32> to vector<1x12x1xf32>
    tpu.vector_store %arg7[%c1_53, %c0_54, %c0_55], %86 {strides = array<i32>} : memref<4x12x1xf32, #tpu.memory_space<vmem>>, vector<1x12x1xf32>,
    %87 = vector.extract_strided_slice %6 {offsets = [0, 1, 0], sizes = [12, 1, 16], strides = [1, 1, 1]} : vector<12x2x16xbf16> to vector<12x1x16xbf16>
    %88 = vector.shape_cast %87 : vector<12x1x16xbf16> to vector<12x16xbf16>
    %89 = vector.extract_strided_slice %8 {offsets = [0, 1, 0], sizes = [12, 1, 16], strides = [1, 1, 1]} : vector<12x2x16xbf16> to vector<12x1x16xbf16>
    %90 = vector.shape_cast %89 : vector<12x1x16xbf16> to vector<12x16xbf16>
    %91 = vector.extract_strided_slice %4 {offsets = [0, 2, 0], sizes = [12, 1, 16], strides = [1, 1, 1]} : vector<12x4x16xbf16> to vector<12x1x16xbf16>
    %92 = vector.shape_cast %91 : vector<12x1x16xbf16> to vector<12x16xbf16>
    %cst_56 = arith.constant dense<0.000000e+00> : vector<12x12xf32>
    %93 = tpu.matmul %92, %88, %cst_56 {dimension_numbers = #tpu.dot_dimension_numbers<[1], [1], [0], [0], [0, 0, 1, 0], [], []>} : vector<12x16xbf16>, vector<12x16xbf16>, vector<12x12xf32> -> vector<12x12xf32>
    %cst_57 = arith.constant 2.500000e-01 : f32
    %94 = vector.broadcast %cst_57 : f32 to vector<12x12xf32>
    %95 = arith.mulf %93, %94 : vector<12x12xf32>
    %c2 = arith.constant 2 : index
    %c0_58 = arith.constant 0 : index
    %c0_59 = arith.constant 0 : index
    %96 = vector.load %arg7[%c2, %c0_58, %c0_59] : memref<4x12x1xf32, #tpu.memory_space<vmem>>, vector<1x12x1xf32>
    %97 = vector.shape_cast %96 : vector<1x12x1xf32> to vector<12x1xf32>
    %cst_60 = arith.constant dense<0xFF800000> : vector<12xf32>
    %98 = vector.multi_reduction <maximumf>, %95, %cst_60 [1] : vector<12x12xf32> to vector<12xf32>
    %99 = vector.shape_cast %98 : vector<12xf32> to vector<12x1xf32>
    %100 = arith.maximumf %97, %99 : vector<12x1xf32>
    %101 = arith.subf %97, %100 : vector<12x1xf32>
    %102 = math.exp %101 : vector<12x1xf32>
    %103 = vector.broadcast %100 : vector<12x1xf32> to vector<12x12xf32>
    %104 = arith.subf %95, %103 : vector<12x12xf32>
    %105 = math.exp %104 : vector<12x12xf32>
    %c2_61 = arith.constant 2 : index
    %c0_62 = arith.constant 0 : index
    %c0_63 = arith.constant 0 : index
    %106 = vector.load %arg8[%c2_61, %c0_62, %c0_63] : memref<4x12x1xf32, #tpu.memory_space<vmem>>, vector<1x12x1xf32>
    %107 = vector.shape_cast %106 : vector<1x12x1xf32> to vector<12x1xf32>
    %108 = arith.mulf %102, %107 : vector<12x1xf32>
    %cst_64 = arith.constant dense<0.000000e+00> : vector<12xf32>
    %109 = vector.multi_reduction <add>, %105, %cst_64 [1] : vector<12x12xf32> to vector<12xf32>
    %110 = vector.shape_cast %109 : vector<12xf32> to vector<12x1xf32>
    %111 = arith.addf %108, %110 : vector<12x1xf32>
    %c2_65 = arith.constant 2 : index
    %c0_66 = arith.constant 0 : index
    %c0_67 = arith.constant 0 : index
    %112 = vector.load %arg8[%c2_65, %c0_66, %c0_67] : memref<4x12x1xf32, #tpu.memory_space<vmem>>, vector<1x12x1xf32>
    %113 = vector.shape_cast %112 : vector<1x12x1xf32> to vector<12x1xf32>
    %114 = vector.shape_cast %111 : vector<12x1xf32> to vector<1x12x1xf32>
    tpu.vector_store %arg8[%c2_65, %c0_66, %c0_67], %114 {strides = array<i32>} : memref<4x12x1xf32, #tpu.memory_space<vmem>>, vector<1x12x1xf32>,
    %c2_68 = arith.constant 2 : index
    %c0_69 = arith.constant 0 : index
    %c0_70 = arith.constant 0 : index
    %115 = vector.load %arg9[%c2_68, %c0_69, %c0_70] : memref<4x12x16xf32, #tpu.memory_space<vmem>>, vector<1x12x16xf32>
    %116 = vector.shape_cast %115 : vector<1x12x16xf32> to vector<12x16xf32>
    %117 = vector.broadcast %102 : vector<12x1xf32> to vector<12x16xf32>
    %118 = arith.mulf %117, %116 : vector<12x16xf32>
    %119 = arith.truncf %105 : vector<12x12xf32> to vector<12x12xbf16>
    %cst_71 = arith.constant dense<0.000000e+00> : vector<12x16xf32>
    %120 = tpu.matmul %119, %90, %cst_71 {dimension_numbers = #tpu.dot_dimension_numbers<[1], [0], [0], [1], [0, 0, 1, 1], [], []>} : vector<12x12xbf16>, vector<12x16xbf16>, vector<12x16xf32> -> vector<12x16xf32>
    %121 = arith.addf %118, %120 : vector<12x16xf32>
    %c2_72 = arith.constant 2 : index
    %c0_73 = arith.constant 0 : index
    %c0_74 = arith.constant 0 : index
    %122 = vector.load %arg9[%c2_72, %c0_73, %c0_74] : memref<4x12x16xf32, #tpu.memory_space<vmem>>, vector<1x12x16xf32>
    %123 = vector.shape_cast %122 : vector<1x12x16xf32> to vector<12x16xf32>
    %124 = vector.shape_cast %121 : vector<12x16xf32> to vector<1x12x16xf32>
    tpu.vector_store %arg9[%c2_72, %c0_73, %c0_74], %124 {strides = array<i32>} : memref<4x12x16xf32, #tpu.memory_space<vmem>>, vector<1x12x16xf32>,
    %c2_75 = arith.constant 2 : index
    %c0_76 = arith.constant 0 : index
    %c0_77 = arith.constant 0 : index
    %125 = vector.load %arg7[%c2_75, %c0_76, %c0_77] : memref<4x12x1xf32, #tpu.memory_space<vmem>>, vector<1x12x1xf32>
    %126 = vector.shape_cast %125 : vector<1x12x1xf32> to vector<12x1xf32>
    %127 = vector.shape_cast %100 : vector<12x1xf32> to vector<1x12x1xf32>
    tpu.vector_store %arg7[%c2_75, %c0_76, %c0_77], %127 {strides = array<i32>} : memref<4x12x1xf32, #tpu.memory_space<vmem>>, vector<1x12x1xf32>,
    %128 = vector.extract_strided_slice %4 {offsets = [0, 3, 0], sizes = [12, 1, 16], strides = [1, 1, 1]} : vector<12x4x16xbf16> to vector<12x1x16xbf16>
    %129 = vector.shape_cast %128 : vector<12x1x16xbf16> to vector<12x16xbf16>
    %cst_78 = arith.constant dense<0.000000e+00> : vector<12x12xf32>
    %130 = tpu.matmul %129, %88, %cst_78 {dimension_numbers = #tpu.dot_dimension_numbers<[1], [1], [0], [0], [0, 0, 1, 0], [], []>} : vector<12x16xbf16>, vector<12x16xbf16>, vector<12x12xf32> -> vector<12x12xf32>
    %cst_79 = arith.constant 2.500000e-01 : f32
    %131 = vector.broadcast %cst_79 : f32 to vector<12x12xf32>
    %132 = arith.mulf %130, %131 : vector<12x12xf32>
    %c3 = arith.constant 3 : index
    %c0_80 = arith.constant 0 : index
    %c0_81 = arith.constant 0 : index
    %133 = vector.load %arg7[%c3, %c0_80, %c0_81] : memref<4x12x1xf32, #tpu.memory_space<vmem>>, vector<1x12x1xf32>
    %134 = vector.shape_cast %133 : vector<1x12x1xf32> to vector<12x1xf32>
    %cst_82 = arith.constant dense<0xFF800000> : vector<12xf32>
    %135 = vector.multi_reduction <maximumf>, %132, %cst_82 [1] : vector<12x12xf32> to vector<12xf32>
    %136 = vector.shape_cast %135 : vector<12xf32> to vector<12x1xf32>
    %137 = arith.maximumf %134, %136 : vector<12x1xf32>
    %138 = arith.subf %134, %137 : vector<12x1xf32>
    %139 = math.exp %138 : vector<12x1xf32>
    %140 = vector.broadcast %137 : vector<12x1xf32> to vector<12x12xf32>
    %141 = arith.subf %132, %140 : vector<12x12xf32>
    %142 = math.exp %141 : vector<12x12xf32>
    %c3_83 = arith.constant 3 : index
    %c0_84 = arith.constant 0 : index
    %c0_85 = arith.constant 0 : index
    %143 = vector.load %arg8[%c3_83, %c0_84, %c0_85] : memref<4x12x1xf32, #tpu.memory_space<vmem>>, vector<1x12x1xf32>
    %144 = vector.shape_cast %143 : vector<1x12x1xf32> to vector<12x1xf32>
    %145 = arith.mulf %139, %144 : vector<12x1xf32>
    %cst_86 = arith.constant dense<0.000000e+00> : vector<12xf32>
    %146 = vector.multi_reduction <add>, %142, %cst_86 [1] : vector<12x12xf32> to vector<12xf32>
    %147 = vector.shape_cast %146 : vector<12xf32> to vector<12x1xf32>
    %148 = arith.addf %145, %147 : vector<12x1xf32>
    %c3_87 = arith.constant 3 : index
    %c0_88 = arith.constant 0 : index
    %c0_89 = arith.constant 0 : index
    %149 = vector.load %arg8[%c3_87, %c0_88, %c0_89] : memref<4x12x1xf32, #tpu.memory_space<vmem>>, vector<1x12x1xf32>
    %150 = vector.shape_cast %149 : vector<1x12x1xf32> to vector<12x1xf32>
    %151 = vector.shape_cast %148 : vector<12x1xf32> to vector<1x12x1xf32>
    tpu.vector_store %arg8[%c3_87, %c0_88, %c0_89], %151 {strides = array<i32>} : memref<4x12x1xf32, #tpu.memory_space<vmem>>, vector<1x12x1xf32>,
    %c3_90 = arith.constant 3 : index
    %c0_91 = arith.constant 0 : index
    %c0_92 = arith.constant 0 : index
    %152 = vector.load %arg9[%c3_90, %c0_91, %c0_92] : memref<4x12x16xf32, #tpu.memory_space<vmem>>, vector<1x12x16xf32>
    %153 = vector.shape_cast %152 : vector<1x12x16xf32> to vector<12x16xf32>
    %154 = vector.broadcast %139 : vector<12x1xf32> to vector<12x16xf32>
    %155 = arith.mulf %154, %153 : vector<12x16xf32>
    %156 = arith.truncf %142 : vector<12x12xf32> to vector<12x12xbf16>
    %cst_93 = arith.constant dense<0.000000e+00> : vector<12x16xf32>
    %157 = tpu.matmul %156, %90, %cst_93 {dimension_numbers = #tpu.dot_dimension_numbers<[1], [0], [0], [1], [0, 0, 1, 1], [], []>} : vector<12x12xbf16>, vector<12x16xbf16>, vector<12x16xf32> -> vector<12x16xf32>
    %158 = arith.addf %155, %157 : vector<12x16xf32>
    %c3_94 = arith.constant 3 : index
    %c0_95 = arith.constant 0 : index
    %c0_96 = arith.constant 0 : index
    %159 = vector.load %arg9[%c3_94, %c0_95, %c0_96] : memref<4x12x16xf32, #tpu.memory_space<vmem>>, vector<1x12x16xf32>
    %160 = vector.shape_cast %159 : vector<1x12x16xf32> to vector<12x16xf32>
    %161 = vector.shape_cast %158 : vector<12x16xf32> to vector<1x12x16xf32>
    tpu.vector_store %arg9[%c3_94, %c0_95, %c0_96], %161 {strides = array<i32>} : memref<4x12x16xf32, #tpu.memory_space<vmem>>, vector<1x12x16xf32>,
    %c3_97 = arith.constant 3 : index
    %c0_98 = arith.constant 0 : index
    %c0_99 = arith.constant 0 : index
    %162 = vector.load %arg7[%c3_97, %c0_98, %c0_99] : memref<4x12x1xf32, #tpu.memory_space<vmem>>, vector<1x12x1xf32>
    %163 = vector.shape_cast %162 : vector<1x12x1xf32> to vector<12x1xf32>
    %164 = vector.shape_cast %137 : vector<12x1xf32> to vector<1x12x1xf32>
    tpu.vector_store %arg7[%c3_97, %c0_98, %c0_99], %164 {strides = array<i32>} : memref<4x12x1xf32, #tpu.memory_space<vmem>>, vector<1x12x1xf32>,
    %c0_i32_100 = arith.constant 0 : i32
    %165 = arith.cmpi eq, %arg2, %c0_i32_100 : i32
    %166 = arith.extui %165 : i1 to i32
    %c0_i32_101 = arith.constant 0 : i32
    %167 = arith.cmpi ne, %166, %c0_i32_101 : i32
    scf.if %167 {
      %c0_102 = arith.constant 0 : index
      %c0_103 = arith.constant 0 : index
      %c0_104 = arith.constant 0 : index
      %168 = vector.load %arg8[%c0_102, %c0_103, %c0_104] : memref<4x12x1xf32, #tpu.memory_space<vmem>>, vector<1x12x1xf32>
      %169 = vector.shape_cast %168 : vector<1x12x1xf32> to vector<12x1xf32>
      %170 = tpu.reciprocal %169 {approx = true} : vector<12x1xf32> -> vector<12x1xf32>
      %c0_105 = arith.constant 0 : index
      %c0_106 = arith.constant 0 : index
      %c0_107 = arith.constant 0 : index
      %171 = vector.load %arg9[%c0_105, %c0_106, %c0_107] : memref<4x12x16xf32, #tpu.memory_space<vmem>>, vector<1x12x16xf32>
      %172 = vector.shape_cast %171 : vector<1x12x16xf32> to vector<12x16xf32>
      %173 = vector.broadcast %170 : vector<12x1xf32> to vector<12x16xf32>
      %174 = arith.mulf %172, %173 : vector<12x16xf32>
      %175 = arith.truncf %174 : vector<12x16xf32> to vector<12x16xbf16>
      %c1_108 = arith.constant 1 : index
      %c0_109 = arith.constant 0 : index
      %c0_110 = arith.constant 0 : index
      %176 = vector.load %arg8[%c1_108, %c0_109, %c0_110] : memref<4x12x1xf32, #tpu.memory_space<vmem>>, vector<1x12x1xf32>
      %177 = vector.shape_cast %176 : vector<1x12x1xf32> to vector<12x1xf32>
      %178 = tpu.reciprocal %177 {approx = true} : vector<12x1xf32> -> vector<12x1xf32>
      %c1_111 = arith.constant 1 : index
      %c0_112 = arith.constant 0 : index
      %c0_113 = arith.constant 0 : index
      %179 = vector.load %arg9[%c1_111, %c0_112, %c0_113] : memref<4x12x16xf32, #tpu.memory_space<vmem>>, vector<1x12x16xf32>
      %180 = vector.shape_cast %179 : vector<1x12x16xf32> to vector<12x16xf32>
      %181 = vector.broadcast %178 : vector<12x1xf32> to vector<12x16xf32>
      %182 = arith.mulf %180, %181 : vector<12x16xf32>
      %183 = arith.truncf %182 : vector<12x16xf32> to vector<12x16xbf16>
      %c2_114 = arith.constant 2 : index
      %c0_115 = arith.constant 0 : index
      %c0_116 = arith.constant 0 : index
      %184 = vector.load %arg8[%c2_114, %c0_115, %c0_116] : memref<4x12x1xf32, #tpu.memory_space<vmem>>, vector<1x12x1xf32>
      %185 = vector.shape_cast %184 : vector<1x12x1xf32> to vector<12x1xf32>
      %186 = tpu.reciprocal %185 {approx = true} : vector<12x1xf32> -> vector<12x1xf32>
      %c2_117 = arith.constant 2 : index
      %c0_118 = arith.constant 0 : index
      %c0_119 = arith.constant 0 : index
      %187 = vector.load %arg9[%c2_117, %c0_118, %c0_119] : memref<4x12x16xf32, #tpu.memory_space<vmem>>, vector<1x12x16xf32>
      %188 = vector.shape_cast %187 : vector<1x12x16xf32> to vector<12x16xf32>
      %189 = vector.broadcast %186 : vector<12x1xf32> to vector<12x16xf32>
      %190 = arith.mulf %188, %189 : vector<12x16xf32>
      %191 = arith.truncf %190 : vector<12x16xf32> to vector<12x16xbf16>
      %c3_120 = arith.constant 3 : index
      %c0_121 = arith.constant 0 : index
      %c0_122 = arith.constant 0 : index
      %192 = vector.load %arg8[%c3_120, %c0_121, %c0_122] : memref<4x12x1xf32, #tpu.memory_space<vmem>>, vector<1x12x1xf32>
      %193 = vector.shape_cast %192 : vector<1x12x1xf32> to vector<12x1xf32>
      %194 = tpu.reciprocal %193 {approx = true} : vector<12x1xf32> -> vector<12x1xf32>
      %c3_123 = arith.constant 3 : index
      %c0_124 = arith.constant 0 : index
      %c0_125 = arith.constant 0 : index
      %195 = vector.load %arg9[%c3_123, %c0_124, %c0_125] : memref<4x12x16xf32, #tpu.memory_space<vmem>>, vector<1x12x16xf32>
      %196 = vector.shape_cast %195 : vector<1x12x16xf32> to vector<12x16xf32>
      %197 = vector.broadcast %194 : vector<12x1xf32> to vector<12x16xf32>
      %198 = arith.mulf %196, %197 : vector<12x16xf32>
      %199 = arith.truncf %198 : vector<12x16xf32> to vector<12x16xbf16>
      %200 = tpu.concatenate %175, %183, %191, %199 in 1 : vector<12x16xbf16>, vector<12x16xbf16>, vector<12x16xbf16>, vector<12x16xbf16> -> vector<12x64xbf16>
      %c0_126 = arith.constant 0 : index
      %c0_127 = arith.constant 0 : index
      %c0_128 = arith.constant 0 : index
      %201 = vector.load %arg6[%c0_126, %c0_127, %c0_128] : memref<1x12x64xbf16, #tpu.memory_space<vmem>>, vector<1x12x64xbf16>
      %202 = vector.shape_cast %201 : vector<1x12x64xbf16> to vector<12x64xbf16>
      %203 = vector.shape_cast %200 : vector<12x64xbf16> to vector<1x12x64xbf16>
      tpu.vector_store %arg6[%c0_126, %c0_127, %c0_128], %203 {strides = array<i32>} : memref<1x12x64xbf16, #tpu.memory_space<vmem>>, vector<1x12x64xbf16>,
    } else {
    }
    return
  }
  func.func @transform_0(%arg0: i32, %arg1: i32, %arg2: i32) -> (i32, i32, i32, i32) {
    %c0_i32 = arith.constant 0 : i32
    %c0_i32_0 = arith.constant 0 : i32
    %c0_i32_1 = arith.constant 0 : i32
    return %arg0, %arg1, %c0_i32, %c0_i32_0 : i32, i32, i32, i32
  }
  func.func @transform_1(%arg0: i32, %arg1: i32, %arg2: i32) -> (i32, i32, i32, i32) {
    %c0_i32 = arith.constant 0 : i32
    %c0_i32_0 = arith.constant 0 : i32
    %c0_i32_1 = arith.constant 0 : i32
    return %arg0, %arg2, %c0_i32, %c0_i32_0 : i32, i32, i32, i32
  }
  func.func @transform_2(%arg0: i32, %arg1: i32, %arg2: i32) -> (i32, i32, i32, i32) {
    %c0_i32 = arith.constant 0 : i32
    %c0_i32_0 = arith.constant 0 : i32
    %c0_i32_1 = arith.constant 0 : i32
    return %arg0, %arg2, %c0_i32, %c0_i32_0 : i32, i32, i32, i32
  }
  func.func @transform_3(%arg0: i32, %arg1: i32, %arg2: i32) -> (i32, i32, i32) {
    %c0_i32 = arith.constant 0 : i32
    %c0_i32_0 = arith.constant 0 : i32
    return %arg0, %arg1, %c0_i32 : i32, i32, i32
  }
}

module attributes {stable_mosaic.version = 11 : i64} {
  func.func @_matmul_kernel(%arg0: i32, %arg1: i32, %arg2: i32, %arg3: memref<24x128xbf16, #tpu.memory_space<vmem>>, %arg4: memref<128x128xbf16, #tpu.memory_space<vmem>>, %arg5: memref<24x128xf32, #tpu.memory_space<vmem>>, %arg6: memref<24x128xf32, #tpu.memory_space<vmem>>) attributes {dimension_semantics = [#tpu.dimension_semantics<parallel>, #tpu.dimension_semantics<parallel>, #tpu.dimension_semantics<arbitrary>], iteration_bounds = array<i64: 1, 1, 1>, scalar_prefetch = 0 : i64, scratch_operands = 1 : i64, tpu.core_type = #tpu.core_type<tc>, window_params = [{transform_indices = @transform_0, window_bounds = array<i64: 24, 128>}, {transform_indices = @transform_1, window_bounds = array<i64: 128, 128>}, {transform_indices = @transform_2, window_bounds = array<i64: 24, 128>}]} {
    %c0_i32 = arith.constant 0 : i32
    %0 = arith.cmpi eq, %arg2, %c0_i32 : i32
    %1 = arith.extui %0 : i1 to i32
    %c0_i32_0 = arith.constant 0 : i32
    %2 = arith.cmpi ne, %1, %c0_i32_0 : i32
    scf.if %2 {
      %cst_10 = arith.constant 0.000000e+00 : f32
      %12 = vector.broadcast %cst_10 : f32 to vector<24x128xf32>
      %c0_11 = arith.constant 0 : index
      %c0_12 = arith.constant 0 : index
      %13 = vector.load %arg6[%c0_11, %c0_12] : memref<24x128xf32, #tpu.memory_space<vmem>>, vector<24x128xf32>
      tpu.vector_store %arg6[%c0_11, %c0_12], %12 {strides = array<i32>} : memref<24x128xf32, #tpu.memory_space<vmem>>, vector<24x128xf32>,
    } else {
    }
    %c0 = arith.constant 0 : index
    %c0_1 = arith.constant 0 : index
    %3 = vector.load %arg6[%c0, %c0_1] : memref<24x128xf32, #tpu.memory_space<vmem>>, vector<24x128xf32>
    %c0_2 = arith.constant 0 : index
    %c0_3 = arith.constant 0 : index
    %4 = vector.load %arg3[%c0_2, %c0_3] : memref<24x128xbf16, #tpu.memory_space<vmem>>, vector<24x128xbf16>
    %c0_4 = arith.constant 0 : index
    %c0_5 = arith.constant 0 : index
    %5 = vector.load %arg4[%c0_4, %c0_5] : memref<128x128xbf16, #tpu.memory_space<vmem>>, vector<128x128xbf16>
    %cst = arith.constant dense<0.000000e+00> : vector<24x128xf32>
    %6 = tpu.matmul %4, %5, %cst {dimension_numbers = #tpu.dot_dimension_numbers<[1], [0], [0], [1], [0, 0, 1, 1], [], []>} : vector<24x128xbf16>, vector<128x128xbf16>, vector<24x128xf32> -> vector<24x128xf32>
    %7 = arith.addf %3, %6 : vector<24x128xf32>
    %c0_6 = arith.constant 0 : index
    %c0_7 = arith.constant 0 : index
    %8 = vector.load %arg6[%c0_6, %c0_7] : memref<24x128xf32, #tpu.memory_space<vmem>>, vector<24x128xf32>
    tpu.vector_store %arg6[%c0_6, %c0_7], %7 {strides = array<i32>} : memref<24x128xf32, #tpu.memory_space<vmem>>, vector<24x128xf32>,
    %c0_i32_8 = arith.constant 0 : i32
    %9 = arith.cmpi eq, %arg2, %c0_i32_8 : i32
    %10 = arith.extui %9 : i1 to i32
    %c0_i32_9 = arith.constant 0 : i32
    %11 = arith.cmpi ne, %10, %c0_i32_9 : i32
    scf.if %11 {
      %c0_10 = arith.constant 0 : index
      %c0_11 = arith.constant 0 : index
      %12 = vector.load %arg6[%c0_10, %c0_11] : memref<24x128xf32, #tpu.memory_space<vmem>>, vector<24x128xf32>
      %c0_12 = arith.constant 0 : index
      %c0_13 = arith.constant 0 : index
      %13 = vector.load %arg5[%c0_12, %c0_13] : memref<24x128xf32, #tpu.memory_space<vmem>>, vector<24x128xf32>
      tpu.vector_store %arg5[%c0_12, %c0_13], %12 {strides = array<i32>} : memref<24x128xf32, #tpu.memory_space<vmem>>, vector<24x128xf32>,
    } else {
    }
    return
  }
  func.func @transform_0(%arg0: i32, %arg1: i32, %arg2: i32) -> (i32, i32) {
    %c0_i32 = arith.constant 0 : i32
    return %arg0, %arg2 : i32, i32
  }
  func.func @transform_1(%arg0: i32, %arg1: i32, %arg2: i32) -> (i32, i32) {
    %c0_i32 = arith.constant 0 : i32
    return %arg2, %arg1 : i32, i32
  }
  func.func @transform_2(%arg0: i32, %arg1: i32, %arg2: i32) -> (i32, i32) {
    %c0_i32 = arith.constant 0 : i32
    return %arg0, %arg1 : i32, i32
  }
}

</mosaic_0001>

<llo_original>
// kernel: mul.37
$region0: #{mul.37}
  %s0 = inlined_call_operand.vmem [shape: f32[3,4,8], index: 0, kind: input, shape index: {}]
  %s1 = inlined_call_operand.vmem [shape: f32[12,8], index: 1, kind: output, shape index: {}]
  $region1: #{mul.37} parent=0
    #allocation0 [shape = 'u8[12288]{0}', space=vmem, size = 0x3000, scoped, tag = 'scoped mem for input reshape']
    %s3 = sshllo.u32 0, 4
    %s4 = smul.addr 4, 2
    %s5 = scalar_lea.vmem %s0, %s4
    %v6 = vld [vmem:[%s5] sm:%s3]
    %s7 = scalar_lea.vmem [#allocation0], 16
    %8 = vst [vmem:[%s7] sm:%s3] %v6
    %s9 = scalar_lea.vmem %s0, 4
    %v10 = vld [vmem:[%s9] sm:%s3]
    %s11 = scalar_lea.vmem [#allocation0], 8
    %12 = vst [vmem:[%s11] sm:%s3] %v10
    %v13 = vld [vmem:[%s0] sm:%s3]
    %14 = vst [vmem:[#allocation0] sm:%s3] %v13
    %v15 = vld [vmem:[#allocation0] sm:$0xf]
    %vm16 = vcmask 64512
    %17 = vst.msk [vmem:[%s1] sm:$0xf] %vm16, %v15
    %s18 = scalar_lea.vmem [#allocation0], 8
    %v19 = vld [vmem:[%s18] sm:$0xf]
    %vm20 = vcmask 64512
    %s21 = scalar_lea.vmem %s1, 4
    %22 = vst.msk [vmem:[%s21] sm:$0xf] %vm20, %v19
    %s23 = scalar_lea.vmem [#allocation0], 16
    %v24 = vld [vmem:[%s23] sm:$0xf]
    %vm25 = vcmask 64512
    %s26 = scalar_lea.vmem %s1, 8
    %27 = vst.msk [vmem:[%s26] sm:$0xf] %vm25, %v24

// kernel: attention_forward.3
$region0: #{attention_forward.3}
  #allocation0 [shape = 'u32[]', space=smem, size = 0x4, offset = 0x4, fixed_abs, tag = 'smem constant byte address 0x4 - core index']
  #allocation1 [shape = 'u32[144,128]{1,0:T(1,128)}', space=vmem, size = 0x12000, scoped, tag = 'internal scratch']
  #allocation2 [shape = 'f32[24,128]{1,0:T(8,128)}', space=vmem, size = 0x3000, scoped, tag = 'scratch operand']
  %s0 = inlined_call_operand.vmem [shape: bf16[24,128], index: 0, kind: input, shape index: {}]
  %s1 = inlined_call_operand.vmem [shape: bf16[128,128], index: 1, kind: input, shape index: {}]
  %s2 = inlined_call_operand.vmem [shape: bf16[24,128], index: 2, kind: output, shape index: {}]
  %s3 = sld [smem:[#allocation0]]
  $region26: #{attention_forward.3} parent=0
    _
  %s5 = ssub.s32 1, %s3
  %s6 = scalar_select 0, %s5, %s3
  // Predicated region
  $region2: #{attention_forward.3} parent=0 // pred_check
    _
  $region3: #{attention_forward.3} parent=0 // pred_check_branch
    %8 = sbr.rel (0) target = $region5
  $region4: #{attention_forward.3} parent=0 // pred_region
    _
  $region5: #{attention_forward.3} parent=0 // pred_fallthru
    _
  // Predicated region
  $region6: #{attention_forward.3} parent=0 // pred_check
    _
  $region7: #{attention_forward.3} parent=0 // pred_check_branch
    %10 = sbr.rel (0) target = $region9
  $region8: #{attention_forward.3} parent=0 // pred_region
    _
  $region9: #{attention_forward.3} parent=0 // pred_fallthru
    _
  %p12 = scmp.eq.s32.totalorder 0, 0
  // Predicated region
  $region10: #{attention_forward.3} parent=0 // pred_check
    %p13 = pneg %p12
  $region11: #{attention_forward.3} parent=0 // pred_check_branch
    %15 = sbr.rel (%p13) target = $region13
  $region12: #{attention_forward.3} parent=0 // pred_region
    %16 = vst [vmem:[#allocation2] sm:$0xff] 0.0
    %17 = vst [vmem:[#allocation2 + $0x8] sm:$0xff] 0.0
    %18 = vst [vmem:[#allocation2 + $0x10] sm:$0xff] 0.0
  $region13: #{attention_forward.3} parent=0 // pred_fallthru
    _
  %v19 = vld [vmem:[#allocation2] sm:$0xff]
  %v20 = vld [vmem:[#allocation2 + $0x8] sm:$0xff]
  %v21 = vld [vmem:[#allocation2 + $0x10] sm:$0xff]
  %v22 = vld [vmem:[%s0] sm:$0xf]
  %v23 = vld [vmem:[%s0 + $0x4] sm:$0xf]
  %v24 = vld [vmem:[%s0 + $0x8] sm:$0xf]
  %v25 = vld [vmem:[%s1] sm:$0xf]
  %v26 = vld [vmem:[%s1 + $0x4] sm:$0xf]
  %v27 = vld [vmem:[%s1 + $0x8] sm:$0xf]
  %v28 = vld [vmem:[%s1 + $0xc] sm:$0xf]
  %v29 = vld [vmem:[%s1 + $0x10] sm:$0xf]
  %v30 = vld [vmem:[%s1 + $0x14] sm:$0xf]
  %v31 = vld [vmem:[%s1 + $0x18] sm:$0xf]
  %v32 = vld [vmem:[%s1 + $0x1c] sm:$0xf]
  %v33 = vld [vmem:[%s1 + $0x20] sm:$0xf]
  %v34 = vld [vmem:[%s1 + $0x24] sm:$0xf]
  %v35 = vld [vmem:[%s1 + $0x28] sm:$0xf]
  %v36 = vld [vmem:[%s1 + $0x2c] sm:$0xf]
  %v37 = vld [vmem:[%s1 + $0x30] sm:$0xf]
  %v38 = vld [vmem:[%s1 + $0x34] sm:$0xf]
  %v39 = vld [vmem:[%s1 + $0x38] sm:$0xf]
  %v40 = vld [vmem:[%s1 + $0x3c] sm:$0xf]
  %v44 = vunpack.c.l.b16 %v22
  %v45 = vunpack.c.l.b16 %v23
  %v46 = vunpack.c.l.b16 %v24
  %v47 = vpack.c.b16 %v45, %v44
  %v48 = vpack.c.b16 %v46, %v46
  %v67 = vunpack.c.l.b16 %v25
  %v68 = vunpack.c.l.b16 %v26
  %v69 = vunpack.c.l.b16 %v27
  %v70 = vunpack.c.l.b16 %v28
  %v71 = vunpack.c.l.b16 %v29
  %v72 = vunpack.c.l.b16 %v30
  %v73 = vunpack.c.l.b16 %v31
  %v74 = vunpack.c.l.b16 %v32
  %v75 = vunpack.c.l.b16 %v33
  %v76 = vunpack.c.l.b16 %v34
  %v77 = vunpack.c.l.b16 %v35
  %v78 = vunpack.c.l.b16 %v36
  %v79 = vunpack.c.l.b16 %v37
  %v80 = vunpack.c.l.b16 %v38
  %v81 = vunpack.c.l.b16 %v39
  %v82 = vunpack.c.l.b16 %v40
  %v83 = vpack.c.b16 %v68, %v67
  %v84 = vpack.c.b16 %v70, %v69
  %v85 = vpack.c.b16 %v72, %v71
  %v86 = vpack.c.b16 %v74, %v73
  %v87 = vpack.c.b16 %v76, %v75
  %v88 = vpack.c.b16 %v78, %v77
  %v89 = vpack.c.b16 %v80, %v79
  %v90 = vpack.c.b16 %v82, %v81
  %99 = vmatprep.subr.bf16.mxu0 0
  %100 = vmatpush1.bf16.msra.mxu0 %v83
  %101 = vmatprep.subr.bf16.mxu0 0
  %102 = vmatpush1.bf16.msra.mxu0 %v84
  %103 = vmatprep.subr.bf16.mxu0 0
  %104 = vmatpush1.bf16.msra.mxu0 %v85
  %105 = vmatprep.subr.bf16.mxu0 0
  %106 = vmatpush1.bf16.msra.mxu0 %v86
  %107 = vmatprep.subr.bf16.mxu0 0
  %108 = vmatpush1.bf16.msra.mxu0 %v87
  %109 = vmatprep.subr.bf16.mxu0 0
  %110 = vmatpush1.bf16.msra.mxu0 %v88
  %111 = vmatprep.subr.bf16.mxu0 0
  %112 = vmatpush1.bf16.msra.mxu0 %v89
  %113 = vmatprep.subr.bf16.mxu0 0
  %114 = vmatpush1.bf16.msra.mxu0 %v90
  %115 = vmatprep.subr.bf16.mxu0 0
  %116 = vmatpush1.bf16.msra.mxu0 0
  %117 = vmatprep.subr.bf16.mxu0 0
  %118 = vmatpush1.bf16.msra.mxu0 0
  %119 = vmatprep.subr.bf16.mxu0 0
  %120 = vmatpush1.bf16.msra.mxu0 0
  %121 = vmatprep.subr.bf16.mxu0 0
  %122 = vmatpush1.bf16.msra.mxu0 0
  %123 = vmatprep.subr.bf16.mxu0 0
  %124 = vmatpush1.bf16.msra.mxu0 0
  %125 = vmatprep.subr.bf16.mxu0 0
  %126 = vmatpush1.bf16.msra.mxu0 0
  %127 = vmatprep.subr.bf16.mxu0 0
  %128 = vmatpush1.bf16.msra.mxu0 0
  %129 = vmatprep.subr.bf16.mxu0 0
  %130 = vmatpush1.bf16.msra.mxu0 0
  %131 = vmatprep.mubr.bf16.mxu0 0
  %132 = vmatmul.mubr.bf16.gmra.mrb[0].mxu0 %v47
  %v133 = vpop.f32.mrb[0].mxu0
  %v134 = vadd.f32 0.0, %v133
  %v135 = vpop.f32.mrb[0].mxu0
  %v136 = vpop.f32.mrb[0].mxu0
  %v137 = vadd.f32 0.0, %v136
  %v138 = vpop.f32.mrb[0].mxu0
  %139 = vmatprep.mubr.bf16.mxu0 0
  %140 = vmatmul.mubr.bf16.gmra.mrb[0].mxu0 %v48
  %v141 = vpop.f32.mrb[0].mxu0
  %v142 = vadd.f32 0.0, %v141
  %v143 = vpop.f32.mrb[0].mxu0
  %v144 = vpop.f32.mrb[0].mxu0
  %v145 = vpop.f32.mrb[0].mxu0
  %146 = vdwg.mxu0
  %v147 = vadd.f32 %v19, %v134
  %v148 = vadd.f32 %v20, %v137
  %v149 = vadd.f32 %v21, %v142
  %150 = vst [vmem:[#allocation2] sm:$0xff] %v147
  %151 = vst [vmem:[#allocation2 + $0x8] sm:$0xff] %v148
  %152 = vst [vmem:[#allocation2 + $0x10] sm:$0xff] %v149
  // Predicated region
  $region14: #{attention_forward.3} parent=0 // pred_check
    %p153 = pneg %p12
  $region15: #{attention_forward.3} parent=0 // pred_check_branch
    %155 = sbr.rel (%p153) target = $region17
  $region16: #{attention_forward.3} parent=0 // pred_region
    %v156 = vld [vmem:[#allocation2] sm:$0xff]
    %v157 = vld [vmem:[#allocation2 + $0x8] sm:$0xff]
    %v158 = vld [vmem:[#allocation2 + $0x10] sm:$0xff]
    %v159 = vpack.c.bf16 %v157, %v156
    %v160 = vpack.c.bf16 %v158, %v158
    %v163 = vunpack.c.l.b16 %v159
    %v164 = vunpack.c.h.b16 %v159
    %v165 = vunpack.c.l.b16 %v160
    %v166 = vpack.c.b16 %v163, %v163
    %v167 = vpack.c.b16 %v164, %v164
    %v168 = vpack.c.b16 %v165, %v165
    %172 = vst [vmem:[%s2] sm:$0xf] %v166
    %173 = vst [vmem:[%s2 + $0x4] sm:$0xf] %v167
    %174 = vst [vmem:[%s2 + $0x8] sm:$0xf] %v168
  $region17: #{attention_forward.3} parent=0 // pred_fallthru
    _
  // Predicated region
  $region18: #{attention_forward.3} parent=0 // pred_check
    _
  $region19: #{attention_forward.3} parent=0 // pred_check_branch
    %176 = sbr.rel (0) target = $region21
  $region20: #{attention_forward.3} parent=0 // pred_region
    _
  $region21: #{attention_forward.3} parent=0 // pred_fallthru
    _
  // Predicated region
  $region22: #{attention_forward.3} parent=0 // pred_check
    _
  $region23: #{attention_forward.3} parent=0 // pred_check_branch
    %178 = sbr.rel (0) target = $region25
  $region24: #{attention_forward.3} parent=0 // pred_region
    _
  $region25: #{attention_forward.3} parent=0 // pred_fallthru
    _

// kernel: attention_forward.5
$region0: #{attention_forward.5}
  #allocation0 [shape = 'u32[]', space=smem, size = 0x4, offset = 0x4, fixed_abs, tag = 'smem constant byte address 0x4 - core index']
  #allocation1 [shape = 'u32[144,128]{1,0:T(1,128)}', space=vmem, size = 0x12000, scoped, tag = 'internal scratch']
  #allocation2 [shape = 'f32[24,128]{1,0:T(8,128)}', space=vmem, size = 0x3000, scoped, tag = 'scratch operand']
  %s0 = inlined_call_operand.vmem [shape: bf16[24,128], index: 0, kind: input, shape index: {}]
  %s1 = inlined_call_operand.vmem [shape: bf16[128,128], index: 1, kind: input, shape index: {}]
  %s2 = inlined_call_operand.hbm [shape: f32[24,128], index: 2, kind: output, shape index: {}]
  %s3 = sld [smem:[#allocation0]]
  $region26: #{attention_forward.5} parent=0
    _
  %s5 = ssub.s32 1, %s3
  %s6 = scalar_select 0, %s5, %s3
  $region1: #{attention_forward.5} parent=0
    #allocation3 [shape = 'u8[12288]{0}', space=vmem, size = 0x3000, scoped, tag = 'output window, operand 0, single buffered']
    #allocation4 [shape = 's32[1]{0}', space=sflag, size = 0x4, scoped, tag = 'scoped memory for attention_forward.5']
    %7 = vsyncpa [#allocation4], 0
    // Predicated region
    $region2: #{attention_forward.5} parent=1 // pred_check
      _
    $region3: #{attention_forward.5} parent=1 // pred_check_branch
      %9 = sbr.rel (0) target = $region5
    $region4: #{attention_forward.5} parent=1 // pred_region
      _
    $region5: #{attention_forward.5} parent=1 // pred_fallthru
      _
    // Predicated region
    $region6: #{attention_forward.5} parent=1 // pred_check
      _
    $region7: #{attention_forward.5} parent=1 // pred_check_branch
      %11 = sbr.rel (0) target = $region9
    $region8: #{attention_forward.5} parent=1 // pred_region
      _
    $region9: #{attention_forward.5} parent=1 // pred_fallthru
      _
    %p13 = scmp.eq.s32.totalorder 0, 0
    // Predicated region
    $region10: #{attention_forward.5} parent=1 // pred_check
      %p14 = pneg %p13
    $region11: #{attention_forward.5} parent=1 // pred_check_branch
      %16 = sbr.rel (%p14) target = $region13
    $region12: #{attention_forward.5} parent=1 // pred_region
      %17 = vst [vmem:[#allocation2] sm:$0xff] 0.0
      %18 = vst [vmem:[#allocation2 + $0x8] sm:$0xff] 0.0
      %19 = vst [vmem:[#allocation2 + $0x10] sm:$0xff] 0.0
    $region13: #{attention_forward.5} parent=1 // pred_fallthru
      _
    %v20 = vld [vmem:[#allocation2] sm:$0xff]
    %v21 = vld [vmem:[#allocation2 + $0x8] sm:$0xff]
    %v22 = vld [vmem:[#allocation2 + $0x10] sm:$0xff]
    %v23 = vld [vmem:[%s0] sm:$0xf]
    %v24 = vld [vmem:[%s0 + $0x4] sm:$0xf]
    %v25 = vld [vmem:[%s0 + $0x8] sm:$0xf]
    %v26 = vld [vmem:[%s1] sm:$0xf]
    %v27 = vld [vmem:[%s1 + $0x4] sm:$0xf]
    %v28 = vld [vmem:[%s1 + $0x8] sm:$0xf]
    %v29 = vld [vmem:[%s1 + $0xc] sm:$0xf]
    %v30 = vld [vmem:[%s1 + $0x10] sm:$0xf]
    %v31 = vld [vmem:[%s1 + $0x14] sm:$0xf]
    %v32 = vld [vmem:[%s1 + $0x18] sm:$0xf]
    %v33 = vld [vmem:[%s1 + $0x1c] sm:$0xf]
    %v34 = vld [vmem:[%s1 + $0x20] sm:$0xf]
    %v35 = vld [vmem:[%s1 + $0x24] sm:$0xf]
    %v36 = vld [vmem:[%s1 + $0x28] sm:$0xf]
    %v37 = vld [vmem:[%s1 + $0x2c] sm:$0xf]
    %v38 = vld [vmem:[%s1 + $0x30] sm:$0xf]
    %v39 = vld [vmem:[%s1 + $0x34] sm:$0xf]
    %v40 = vld [vmem:[%s1 + $0x38] sm:$0xf]
    %v41 = vld [vmem:[%s1 + $0x3c] sm:$0xf]
    %v45 = vunpack.c.l.b16 %v23
    %v46 = vunpack.c.l.b16 %v24
    %v47 = vunpack.c.l.b16 %v25
    %v48 = vpack.c.b16 %v46, %v45
    %v49 = vpack.c.b16 %v47, %v47
    %v68 = vunpack.c.l.b16 %v26
    %v69 = vunpack.c.l.b16 %v27
    %v70 = vunpack.c.l.b16 %v28
    %v71 = vunpack.c.l.b16 %v29
    %v72 = vunpack.c.l.b16 %v30
    %v73 = vunpack.c.l.b16 %v31
    %v74 = vunpack.c.l.b16 %v32
    %v75 = vunpack.c.l.b16 %v33
    %v76 = vunpack.c.l.b16 %v34
    %v77 = vunpack.c.l.b16 %v35
    %v78 = vunpack.c.l.b16 %v36
    %v79 = vunpack.c.l.b16 %v37
    %v80 = vunpack.c.l.b16 %v38
    %v81 = vunpack.c.l.b16 %v39
    %v82 = vunpack.c.l.b16 %v40
    %v83 = vunpack.c.l.b16 %v41
    %v84 = vpack.c.b16 %v69, %v68
    %v85 = vpack.c.b16 %v71, %v70
    %v86 = vpack.c.b16 %v73, %v72
    %v87 = vpack.c.b16 %v75, %v74
    %v88 = vpack.c.b16 %v77, %v76
    %v89 = vpack.c.b16 %v79, %v78
    %v90 = vpack.c.b16 %v81, %v80
    %v91 = vpack.c.b16 %v83, %v82
    %100 = vmatprep.subr.bf16.mxu0 0
    %101 = vmatpush1.bf16.msra.mxu0 %v84
    %102 = vmatprep.subr.bf16.mxu0 0
    %103 = vmatpush1.bf16.msra.mxu0 %v85
    %104 = vmatprep.subr.bf16.mxu0 0
    %105 = vmatpush1.bf16.msra.mxu0 %v86
    %106 = vmatprep.subr.bf16.mxu0 0
    %107 = vmatpush1.bf16.msra.mxu0 %v87
    %108 = vmatprep.subr.bf16.mxu0 0
    %109 = vmatpush1.bf16.msra.mxu0 %v88
    %110 = vmatprep.subr.bf16.mxu0 0
    %111 = vmatpush1.bf16.msra.mxu0 %v89
    %112 = vmatprep.subr.bf16.mxu0 0
    %113 = vmatpush1.bf16.msra.mxu0 %v90
    %114 = vmatprep.subr.bf16.mxu0 0
    %115 = vmatpush1.bf16.msra.mxu0 %v91
    %116 = vmatprep.subr.bf16.mxu0 0
    %117 = vmatpush1.bf16.msra.mxu0 0
    %118 = vmatprep.subr.bf16.mxu0 0
    %119 = vmatpush1.bf16.msra.mxu0 0
    %120 = vmatprep.subr.bf16.mxu0 0
    %121 = vmatpush1.bf16.msra.mxu0 0
    %122 = vmatprep.subr.bf16.mxu0 0
    %123 = vmatpush1.bf16.msra.mxu0 0
    %124 = vmatprep.subr.bf16.mxu0 0
    %125 = vmatpush1.bf16.msra.mxu0 0
    %126 = vmatprep.subr.bf16.mxu0 0
    %127 = vmatpush1.bf16.msra.mxu0 0
    %128 = vmatprep.subr.bf16.mxu0 0
    %129 = vmatpush1.bf16.msra.mxu0 0
    %130 = vmatprep.subr.bf16.mxu0 0
    %131 = vmatpush1.bf16.msra.mxu0 0
    %132 = vmatprep.mubr.bf16.mxu0 0
    %133 = vmatmul.mubr.bf16.gmra.mrb[0].mxu0 %v48
    %v134 = vpop.f32.mrb[0].mxu0
    %v135 = vadd.f32 0.0, %v134
    %v136 = vpop.f32.mrb[0].mxu0
    %v137 = vpop.f32.mrb[0].mxu0
    %v138 = vadd.f32 0.0, %v137
    %v139 = vpop.f32.mrb[0].mxu0
    %140 = vmatprep.mubr.bf16.mxu0 0
    %141 = vmatmul.mubr.bf16.gmra.mrb[0].mxu0 %v49
    %v142 = vpop.f32.mrb[0].mxu0
    %v143 = vadd.f32 0.0, %v142
    %v144 = vpop.f32.mrb[0].mxu0
    %v145 = vpop.f32.mrb[0].mxu0
    %v146 = vpop.f32.mrb[0].mxu0
    %147 = vdwg.mxu0
    %v148 = vadd.f32 %v20, %v135
    %v149 = vadd.f32 %v21, %v138
    %v150 = vadd.f32 %v22, %v143
    %151 = vst [vmem:[#allocation2] sm:$0xff] %v148
    %152 = vst [vmem:[#allocation2 + $0x8] sm:$0xff] %v149
    %153 = vst [vmem:[#allocation2 + $0x10] sm:$0xff] %v150
    // Predicated region
    $region14: #{attention_forward.5} parent=1 // pred_check
      %p154 = pneg %p13
    $region15: #{attention_forward.5} parent=1 // pred_check_branch
      %156 = sbr.rel (%p154) target = $region17
    $region16: #{attention_forward.5} parent=1 // pred_region
      %v157 = vld [vmem:[#allocation2] sm:$0xff]
      %v158 = vld [vmem:[#allocation2 + $0x8] sm:$0xff]
      %v159 = vld [vmem:[#allocation2 + $0x10] sm:$0xff]
      %160 = vst [vmem:[#allocation3] sm:$0xff] %v157
      %161 = vst [vmem:[#allocation3 + $0x8] sm:$0xff] %v158
      %162 = vst [vmem:[#allocation3 + $0x10] sm:$0xff] %v159
    $region17: #{attention_forward.5} parent=1 // pred_fallthru
      _
    // Predicated region
    $region18: #{attention_forward.5} parent=1 // pred_check
      _
    $region19: #{attention_forward.5} parent=1 // pred_check_branch
      %164 = sbr.rel (0) target = $region21
    $region20: #{attention_forward.5} parent=1 // pred_region
      %s166 = ssub.s32 384, 384
      %167 = vsyncadd [#allocation4], %s166
      %s168 = sshll.u32 [#allocation3], 4
      %s169 = int_to_ptr.vmem [resolvable:$true] %s168
      %174 = dma.vmem_to_hbm [thread:$0]  %s169, 384, %s2, [#allocation4], 128, 128, 8
    $region21: #{attention_forward.5} parent=1 // pred_fallthru
      _
    // Predicated region
    $region22: #{attention_forward.5} parent=1 // pred_check
      _
    $region23: #{attention_forward.5} parent=1 // pred_check_branch
      %176 = sbr.rel (0) target = $region25
    $region24: #{attention_forward.5} parent=1 // pred_region
      %177 = dma.done [#allocation4], 384
    $region25: #{attention_forward.5} parent=1 // pred_fallthru
      _
    %178 = vsyncpa [#allocation4], 1

// kernel: attention_forward.4
$region0: #{attention_forward.4}
  #allocation0 [shape = 'u32[]', space=smem, size = 0x4, offset = 0x4, fixed_abs, tag = 'smem constant byte address 0x4 - core index']
  #allocation1 [shape = 'u32[144,128]{1,0:T(1,128)}', space=vmem, size = 0x12000, scoped, tag = 'internal scratch']
  #allocation2 [shape = 'f32[4,12,1]{2,1,0:T(8,128)}', space=vmem, size = 0x8000, scoped, tag = 'scratch operand']
  #allocation3 [shape = 'f32[4,12,1]{2,1,0:T(8,128)}', space=vmem, size = 0x8000, scoped, tag = 'scratch operand']
  #allocation4 [shape = 'f32[4,12,16]{2,1,0:T(8,128)}', space=vmem, size = 0x8000, scoped, tag = 'scratch operand']
  %s0 = inlined_call_operand.vmem [shape: bf16[2,12,4,16], index: 0, kind: input, shape index: {}]
  %s1 = inlined_call_operand.vmem [shape: bf16[2,12,2,16], index: 1, kind: input, shape index: {}]
  %s2 = inlined_call_operand.vmem [shape: bf16[2,12,2,16], index: 2, kind: input, shape index: {}]
  %s3 = inlined_call_operand.vmem [shape: bf16[2,12,64], index: 3, kind: output, shape index: {}]
  %s4 = sld [smem:[#allocation0]]
  $region53: #{attention_forward.4} parent=0
    _
  %s6 = ssub.s32 1, %s4
  %s7 = scalar_select 0, %s6, %s4
  loop: start=0, step=1, limit=4
  $region2: #{attention_forward.4} parent=0 // loop_pre_header
    _
  $region3: #{attention_forward.4} parent=0 // loop_header
    %s9 = sphi 0, %s13
    %p10 = scmp.ge.s32.totalorder %s9, 4
    %s16 = sphi 0, %s35
    %s17 = sphi 0, %s31
    %s18 = sphi 0, %s27
    %s19 = sphi 0, %s16
    %s20 = sphi 0, %s17
    %s21 = sphi 0, %s18
    %s22 = sphi 0, %s19
    %s23 = sphi 0, %s20
    %s24 = sphi 0, %s21
    %s40 = sphi 0, %s42
    %s43 = sphi 0, %s40
    %s44 = sphi 0, %s43
    %s60 = sphi 0, %s44
    %s68 = sphi 0, %s70
    %s71 = sphi 0, %s68
    %s72 = sphi 0, %s71
    %s88 = sphi 0, %s72
    %s96 = sphi 0, %s98
    %s99 = sphi 0, %s96
    %s100 = sphi 0, %s99
    %s116 = sphi 0, %s100
    %s124 = sphi 0, %s126
    %s127 = sphi 0, %s124
    %s128 = sphi 0, %s127
    %s144 = sphi 0, %s128
  $region4: #{attention_forward.4} parent=0 // loop_header_branch
    %12 = sbr.rel (%p10) target = $region8
  $region5: #{attention_forward.4} parent=0 // loop_body
    %s14 = ssub.s32 %s9, 1
    %s15 = ssub.s32 %s9, 2
    %s25 = sadd.s32 1, %s18
    %p26 = scmp.ge.s32.totalorder %s25, 1
    %s27 = scalar_select %p26, 0, %s25
    %s28 = sadd.s32 1, %s17
    %s29 = scalar_select %p26, %s28, %s17
    %p30 = scmp.ge.s32.totalorder %s29, 1
    %s31 = scalar_select %p30, 0, %s29
    %s32 = sadd.s32 1, %s16
    %s33 = scalar_select %p30, %s32, %s16
    %p34 = scmp.ge.s32.totalorder %s33, 2
    %s35 = scalar_select %p34, 0, %s33
    %s36 = ssub.s32 %s16, %s35
    %s37 = ssub.s32 %s17, %s31
    %s38 = sor.u32 %s36, %s37
    %p39 = scmp.eq.s32.totalorder %s38, 0
    %s41 = sadd.s32 %s40, 1
    %s42 = scalar_select %p39, %s40, %s41
    %p45 = pneg %p39
    %p46 = scmp.eq.s32.totalorder %s9, 1
    %p47 = por %p45, %p46
    %p48 = scmp.ne.s32.totalorder %s40, %s43
    %p49 = scmp.eq.s32.totalorder %s9, 0
    %p50 = por %p48, %p49
    %p51 = scmp.ne.s32.totalorder %s40, %s43
    %p52 = scmp.eq.s32.totalorder %s14, 1
    %p53 = por %p51, %p52
    %p54 = scmp.ne.s32.totalorder %s43, %s44
    %p55 = scmp.eq.s32.totalorder %s14, 0
    %p56 = por %p54, %p55
    %p57 = scmp.ne.s32.totalorder %s43, %s44
    %p58 = scmp.eq.s32.totalorder %s15, 1
    %p59 = por %p57, %p58
    %p61 = scmp.ne.s32.totalorder %s44, %s60
    %p62 = scmp.eq.s32.totalorder %s15, 0
    %p63 = por %p61, %p62
    %s64 = ssub.s32 %s16, %s35
    %s65 = ssub.s32 %s18, %s27
    %s66 = sor.u32 %s64, %s65
    %p67 = scmp.eq.s32.totalorder %s66, 0
    %s69 = sadd.s32 %s68, 1
    %s70 = scalar_select %p67, %s68, %s69
    %p73 = pneg %p67
    %p74 = scmp.eq.s32.totalorder %s9, 1
    %p75 = por %p73, %p74
    %p76 = scmp.ne.s32.totalorder %s68, %s71
    %p77 = scmp.eq.s32.totalorder %s9, 0
    %p78 = por %p76, %p77
    %p79 = scmp.ne.s32.totalorder %s68, %s71
    %p80 = scmp.eq.s32.totalorder %s14, 1
    %p81 = por %p79, %p80
    %p82 = scmp.ne.s32.totalorder %s71, %s72
    %p83 = scmp.eq.s32.totalorder %s14, 0
    %p84 = por %p82, %p83
    %p85 = scmp.ne.s32.totalorder %s71, %s72
    %p86 = scmp.eq.s32.totalorder %s15, 1
    %p87 = por %p85, %p86
    %p89 = scmp.ne.s32.totalorder %s72, %s88
    %p90 = scmp.eq.s32.totalorder %s15, 0
    %p91 = por %p89, %p90
    %s92 = ssub.s32 %s16, %s35
    %s93 = ssub.s32 %s18, %s27
    %s94 = sor.u32 %s92, %s93
    %p95 = scmp.eq.s32.totalorder %s94, 0
    %s97 = sadd.s32 %s96, 1
    %s98 = scalar_select %p95, %s96, %s97
    %p101 = pneg %p95
    %p102 = scmp.eq.s32.totalorder %s9, 1
    %p103 = por %p101, %p102
    %p104 = scmp.ne.s32.totalorder %s96, %s99
    %p105 = scmp.eq.s32.totalorder %s9, 0
    %p106 = por %p104, %p105
    %p107 = scmp.ne.s32.totalorder %s96, %s99
    %p108 = scmp.eq.s32.totalorder %s14, 1
    %p109 = por %p107, %p108
    %p110 = scmp.ne.s32.totalorder %s99, %s100
    %p111 = scmp.eq.s32.totalorder %s14, 0
    %p112 = por %p110, %p111
    %p113 = scmp.ne.s32.totalorder %s99, %s100
    %p114 = scmp.eq.s32.totalorder %s15, 1
    %p115 = por %p113, %p114
    %p117 = scmp.ne.s32.totalorder %s100, %s116
    %p118 = scmp.eq.s32.totalorder %s15, 0
    %p119 = por %p117, %p118
    %s120 = ssub.s32 %s16, %s35
    %s121 = ssub.s32 %s17, %s31
    %s122 = sor.u32 %s120, %s121
    %p123 = scmp.eq.s32.totalorder %s122, 0
    %s125 = sadd.s32 %s124, 1
    %s126 = scalar_select %p123, %s124, %s125
    %p129 = pneg %p123
    %p130 = scmp.eq.s32.totalorder %s9, 1
    %p131 = por %p129, %p130
    %p132 = scmp.ne.s32.totalorder %s124, %s127
    %p133 = scmp.eq.s32.totalorder %s9, 0
    %p134 = por %p132, %p133
    %p135 = scmp.ne.s32.totalorder %s124, %s127
    %p136 = scmp.eq.s32.totalorder %s14, 1
    %p137 = por %p135, %p136
    %p138 = scmp.ne.s32.totalorder %s127, %s128
    %p139 = scmp.eq.s32.totalorder %s14, 0
    %p140 = por %p138, %p139
    %p141 = scmp.ne.s32.totalorder %s127, %s128
    %p142 = scmp.eq.s32.totalorder %s15, 1
    %p143 = por %p141, %p142
    %p145 = scmp.ne.s32.totalorder %s128, %s144
    %p146 = scmp.eq.s32.totalorder %s15, 0
    %p147 = por %p145, %p146
    %p148 = scmp.le.s32.totalorder 1, %s9
    %p149 = scmp.lt.s32.totalorder %s9, 3
    %p150 = pnand %p148, %p149
    %p151 = pneg %p150
    // Predicated region
    $region9: #{attention_forward.4} parent=5 // pred_check
      _
    $region10: #{attention_forward.4} parent=5 // pred_check_branch
      %153 = sbr.rel (%p150) target = $region12
    $region11: #{attention_forward.4} parent=5 // pred_region
      %s154 = ssub.s32 %s9, 1
    $region12: #{attention_forward.4} parent=5 // pred_fallthru
      _
    %p155 = scmp.lt.s32.totalorder %s9, 2
    // Predicated region
    $region13: #{attention_forward.4} parent=5 // pred_check
      %p156 = pneg %p155
    $region14: #{attention_forward.4} parent=5 // pred_check_branch
      %158 = sbr.rel (%p156) target = $region16
    $region15: #{attention_forward.4} parent=5 // pred_region
      // Predicated region
      $region17: #{attention_forward.4} parent=15 // pred_check
        %p159 = pneg %p50
      $region18: #{attention_forward.4} parent=15 // pred_check_branch
        %161 = sbr.rel (%p159) target = $region20
      $region19: #{attention_forward.4} parent=15 // pred_region
        %s162 = smul.u32 12, %s17
        %p163 = scmp.lt.s32.totalorder %s16, 1
        %s164 = scalar_select %p163, %s16, 1
        %p165 = scmp.lt.s32.totalorder %s162, 11
        %s166 = scalar_select %p165, %s162, 11
        %s167 = smul.addr %s164, 12
        %s168 = sadd.s32 %s166, %s167
        %s169 = smul.addr %s168, 2
        %s170 = scalar_lea.vmem %s0, %s169
        %s171 = smul.u32 12, %s17
      $region20: #{attention_forward.4} parent=15 // pred_fallthru
        _
      // Predicated region
      $region21: #{attention_forward.4} parent=15 // pred_check
        %p172 = pneg %p78
      $region22: #{attention_forward.4} parent=15 // pred_check_branch
        %174 = sbr.rel (%p172) target = $region24
      $region23: #{attention_forward.4} parent=15 // pred_region
        %s175 = smul.u32 12, %s18
        %p176 = scmp.lt.s32.totalorder %s16, 1
        %s177 = scalar_select %p176, %s16, 1
        %p178 = scmp.lt.s32.totalorder %s175, 11
        %s179 = scalar_select %p178, %s175, 11
        %s180 = smul.addr %s177, 12
        %s181 = sadd.s32 %s179, %s180
        %s182 = scalar_lea.vmem %s1, %s181
        %s183 = smul.u32 12, %s18
      $region24: #{attention_forward.4} parent=15 // pred_fallthru
        _
      // Predicated region
      $region25: #{attention_forward.4} parent=15 // pred_check
        %p184 = pneg %p106
      $region26: #{attention_forward.4} parent=15 // pred_check_branch
        %186 = sbr.rel (%p184) target = $region28
      $region27: #{attention_forward.4} parent=15 // pred_region
        %s187 = smul.u32 12, %s18
        %p188 = scmp.lt.s32.totalorder %s16, 1
        %s189 = scalar_select %p188, %s16, 1
        %p190 = scmp.lt.s32.totalorder %s187, 11
        %s191 = scalar_select %p190, %s187, 11
        %s192 = smul.addr %s189, 12
        %s193 = sadd.s32 %s191, %s192
        %s194 = scalar_lea.vmem %s2, %s193
        %s195 = smul.u32 12, %s18
      $region28: #{attention_forward.4} parent=15 // pred_fallthru
        _
    $region16: #{attention_forward.4} parent=5 // pred_fallthru
      _
    %p196 = scmp.le.s32.totalorder 1, %s9
    %p197 = scmp.lt.s32.totalorder %s9, 3
    %p198 = pnand %p196, %p197
    %p199 = pneg %p198
    // Predicated region
    $region29: #{attention_forward.4} parent=5 // pred_check
      _
    $region30: #{attention_forward.4} parent=5 // pred_check_branch
      %201 = sbr.rel (%p198) target = $region32
    $region31: #{attention_forward.4} parent=5 // pred_region
      %s202 = ssub.s32 %s9, 1
      %s203 = smul.u32 12, %s20
      %p204 = scmp.lt.s32.totalorder %s19, 1
      %s205 = scalar_select %p204, %s19, 1
      %p206 = scmp.lt.s32.totalorder %s203, 11
      %s207 = scalar_select %p206, %s203, 11
      %s208 = smul.addr %s205, 12
      %s209 = sadd.s32 %s207, %s208
      %s210 = smul.addr %s209, 2
      %s211 = scalar_lea.vmem %s0, %s210
      %p212 = pneg %p56
      %p213 = pneg %p53
      %s214 = smul.u32 12, %s21
      %p215 = scmp.lt.s32.totalorder %s19, 1
      %s216 = scalar_select %p215, %s19, 1
      %p217 = scmp.lt.s32.totalorder %s214, 11
      %s218 = scalar_select %p217, %s214, 11
      %s219 = smul.addr %s216, 12
      %s220 = sadd.s32 %s218, %s219
      %s221 = scalar_lea.vmem %s1, %s220
      %p222 = pneg %p84
      %p223 = pneg %p81
      %s224 = smul.u32 12, %s21
      %p225 = scmp.lt.s32.totalorder %s19, 1
      %s226 = scalar_select %p225, %s19, 1
      %p227 = scmp.lt.s32.totalorder %s224, 11
      %s228 = scalar_select %p227, %s224, 11
      %s229 = smul.addr %s226, 12
      %s230 = sadd.s32 %s228, %s229
      %s231 = scalar_lea.vmem %s2, %s230
      %p232 = pneg %p112
      %p233 = pneg %p109
      %p234 = pneg %p140
      %p235 = pneg %p137
      %s236 = smul.u32 2, %s20
      %p237 = scmp.lt.s32.totalorder %s19, 1
      %s238 = scalar_select %p237, %s19, 1
      %p239 = scmp.lt.s32.totalorder %s236, 1
      %s240 = scalar_select %p239, %s236, 1
      %s241 = smul.addr %s238, 2
      %s242 = sadd.s32 %s240, %s241
      %s243 = smul.addr %s242, 4
      %s244 = scalar_lea.vmem %s3, %s243
      %s245 = smul.u32 12, %s20
      %p246 = scmp.lt.s32.totalorder %s19, 1
      %s247 = scalar_select %p246, %s19, 1
      %p248 = scmp.lt.s32.totalorder %s245, 11
      %s249 = scalar_select %p248, %s245, 11
      %s250 = smul.addr %s247, 12
      %s251 = sadd.s32 %s249, %s250
      %s252 = smul.addr %s251, 2
      %s253 = scalar_lea.vmem %s0, %s252
      %s254 = smul.u32 12, %s20
      %s255 = smul.u32 12, %s21
      %p256 = scmp.lt.s32.totalorder %s19, 1
      %s257 = scalar_select %p256, %s19, 1
      %p258 = scmp.lt.s32.totalorder %s255, 11
      %s259 = scalar_select %p258, %s255, 11
      %s260 = smul.addr %s257, 12
      %s261 = sadd.s32 %s259, %s260
      %s262 = scalar_lea.vmem %s1, %s261
      %s263 = smul.u32 12, %s21
      %s264 = smul.u32 12, %s21
      %p265 = scmp.lt.s32.totalorder %s19, 1
      %s266 = scalar_select %p265, %s19, 1
      %p267 = scmp.lt.s32.totalorder %s264, 11
      %s268 = scalar_select %p267, %s264, 11
      %s269 = smul.addr %s266, 12
      %s270 = sadd.s32 %s268, %s269
      %s271 = scalar_lea.vmem %s2, %s270
      %s272 = smul.u32 12, %s21
      %s273 = smul.u32 2, %s20
      %p274 = scmp.lt.s32.totalorder %s19, 1
      %s275 = scalar_select %p274, %s19, 1
      %p276 = scmp.lt.s32.totalorder %s273, 1
      %s277 = scalar_select %p276, %s273, 1
      %s278 = smul.addr %s275, 2
      %s279 = sadd.s32 %s277, %s278
      %s280 = smul.addr %s279, 4
      %s281 = scalar_lea.vmem %s3, %s280
      %s282 = smul.u32 2, %s20
      %p284 = scmp.eq.s32.totalorder %s21, 0
      // Predicated region
      $region33: #{attention_forward.4} parent=31 // pred_check
        %p285 = pneg %p284
      $region34: #{attention_forward.4} parent=31 // pred_check_branch
        %287 = sbr.rel (%p285) target = $region36
      $region35: #{attention_forward.4} parent=31 // pred_region
        %vm288 = vcmask 7168
        %289 = vst.msk [vmem:[#allocation2] sm:$0xff] %vm288, -inf
        %vm290 = vcmask 3072
        %291 = vst.msk [vmem:[#allocation2 + $0x8] sm:$0xf] %vm290, -inf
        %292 = vst.msk [vmem:[#allocation2 + $0x10] sm:$0xff] %vm288, -inf
        %293 = vst.msk [vmem:[#allocation2 + $0x18] sm:$0xf] %vm290, -inf
        %294 = vst.msk [vmem:[#allocation2 + $0x20] sm:$0xff] %vm288, -inf
        %295 = vst.msk [vmem:[#allocation2 + $0x28] sm:$0xf] %vm290, -inf
        %296 = vst.msk [vmem:[#allocation2 + $0x30] sm:$0xff] %vm288, -inf
        %297 = vst.msk [vmem:[#allocation2 + $0x38] sm:$0xf] %vm290, -inf
        %298 = vst.msk [vmem:[#allocation3] sm:$0xff] %vm288, 0.0
        %299 = vst.msk [vmem:[#allocation3 + $0x8] sm:$0xf] %vm290, 0.0
        %300 = vst.msk [vmem:[#allocation3 + $0x10] sm:$0xff] %vm288, 0.0
        %301 = vst.msk [vmem:[#allocation3 + $0x18] sm:$0xf] %vm290, 0.0
        %302 = vst.msk [vmem:[#allocation3 + $0x20] sm:$0xff] %vm288, 0.0
        %303 = vst.msk [vmem:[#allocation3 + $0x28] sm:$0xf] %vm290, 0.0
        %304 = vst.msk [vmem:[#allocation3 + $0x30] sm:$0xff] %vm288, 0.0
        %305 = vst.msk [vmem:[#allocation3 + $0x38] sm:$0xf] %vm290, 0.0
        %vm306 = vcmask 130048
        %307 = vst.msk [vmem:[#allocation4] sm:$0xff] %vm306, 0.0
        %vm308 = vcmask 125952
        %309 = vst.msk [vmem:[#allocation4 + $0x8] sm:$0xf] %vm308, 0.0
        %310 = vst.msk [vmem:[#allocation4 + $0x10] sm:$0xff] %vm306, 0.0
        %311 = vst.msk [vmem:[#allocation4 + $0x18] sm:$0xf] %vm308, 0.0
        %312 = vst.msk [vmem:[#allocation4 + $0x20] sm:$0xff] %vm306, 0.0
        %313 = vst.msk [vmem:[#allocation4 + $0x28] sm:$0xf] %vm308, 0.0
        %314 = vst.msk [vmem:[#allocation4 + $0x30] sm:$0xff] %vm306, 0.0
        %315 = vst.msk [vmem:[#allocation4 + $0x38] sm:$0xf] %vm308, 0.0
      $region36: #{attention_forward.4} parent=31 // pred_fallthru
        _
      %v316 = vld [vmem:[%s253] sm:$0x3]
      %v317 = vld [vmem:[%s253 + $0x2] sm:$0x3]
      %v318 = vld [vmem:[%s253 + $0x4] sm:$0x3]
      %v319 = vld [vmem:[%s253 + $0x6] sm:$0x3]
      %v320 = vld [vmem:[%s253 + $0x8] sm:$0x3]
      %v321 = vld [vmem:[%s253 + $0xa] sm:$0x3]
      %v322 = vld [vmem:[%s253 + $0xc] sm:$0x3]
      %v323 = vld [vmem:[%s253 + $0xe] sm:$0x3]
      %v324 = vld [vmem:[%s253 + $0x10] sm:$0x3]
      %v325 = vld [vmem:[%s253 + $0x12] sm:$0x3]
      %v326 = vld [vmem:[%s253 + $0x14] sm:$0x3]
      %v327 = vld [vmem:[%s253 + $0x16] sm:$0x3]
      %v328 = vld [vmem:[%s262] sm:$0x1]
      %v329 = vld [vmem:[%s262 + $0x1] sm:$0x1]
      %v330 = vld [vmem:[%s262 + $0x2] sm:$0x1]
      %v331 = vld [vmem:[%s262 + $0x3] sm:$0x1]
      %v332 = vld [vmem:[%s262 + $0x4] sm:$0x1]
      %v333 = vld [vmem:[%s262 + $0x5] sm:$0x1]
      %v334 = vld [vmem:[%s262 + $0x6] sm:$0x1]
      %v335 = vld [vmem:[%s262 + $0x7] sm:$0x1]
      %v336 = vld [vmem:[%s262 + $0x8] sm:$0x1]
      %v337 = vld [vmem:[%s262 + $0x9] sm:$0x1]
      %v338 = vld [vmem:[%s262 + $0xa] sm:$0x1]
      %v339 = vld [vmem:[%s262 + $0xb] sm:$0x1]
      %v340 = vld [vmem:[%s271] sm:$0x1]
      %v341 = vld [vmem:[%s271 + $0x1] sm:$0x1]
      %v342 = vld [vmem:[%s271 + $0x2] sm:$0x1]
      %v343 = vld [vmem:[%s271 + $0x3] sm:$0x1]
      %v344 = vld [vmem:[%s271 + $0x4] sm:$0x1]
      %v345 = vld [vmem:[%s271 + $0x5] sm:$0x1]
      %v346 = vld [vmem:[%s271 + $0x6] sm:$0x1]
      %v347 = vld [vmem:[%s271 + $0x7] sm:$0x1]
      %v348 = vld [vmem:[%s271 + $0x8] sm:$0x1]
      %v349 = vld [vmem:[%s271 + $0x9] sm:$0x1]
      %v350 = vld [vmem:[%s271 + $0xa] sm:$0x1]
      %v351 = vld [vmem:[%s271 + $0xb] sm:$0x1]
      %v365 = vunpack.c.l.s4 1983009808
      %v366 = vunpack.c.0.s8 %v365
      %v367 = vlaneseq
      %v368 = vshrl.u32 %v367, 7
      %v369 = vsub.s32 %v366, %v368
      %v370 = vrot.slane %v316, %v369
      %v372 = vunpack.c.l.s4 1983009808
      %v373 = vunpack.c.0.s8 %v372
      %v374 = vlaneseq
      %v375 = vshrl.u32 %v374, 7
      %v376 = vsub.s32 %v373, %v375
      %v377 = vrot.slane %v317, %v376
      %v379 = vunpack.c.l.s4 1983009808
      %v380 = vunpack.c.0.s8 %v379
      %v381 = vlaneseq
      %v382 = vshrl.u32 %v381, 7
      %v383 = vsub.s32 %v380, %v382
      %v384 = vrot.slane %v318, %v383
      %v386 = vunpack.c.l.s4 1983009808
      %v387 = vunpack.c.0.s8 %v386
      %v388 = vlaneseq
      %v389 = vshrl.u32 %v388, 7
      %v390 = vsub.s32 %v387, %v389
      %v391 = vrot.slane %v319, %v390
      %v393 = vunpack.c.l.s4 1983009808
      %v394 = vunpack.c.0.s8 %v393
      %v395 = vlaneseq
      %v396 = vshrl.u32 %v395, 7
      %v397 = vsub.s32 %v394, %v396
      %v398 = vrot.slane %v320, %v397
      %v400 = vunpack.c.l.s4 1983009808
      %v401 = vunpack.c.0.s8 %v400
      %v402 = vlaneseq
      %v403 = vshrl.u32 %v402, 7
      %v404 = vsub.s32 %v401, %v403
      %v405 = vrot.slane %v321, %v404
      %v407 = vunpack.c.l.s4 1983009808
      %v408 = vunpack.c.0.s8 %v407
      %v409 = vlaneseq
      %v410 = vshrl.u32 %v409, 7
      %v411 = vsub.s32 %v408, %v410
      %v412 = vrot.slane %v322, %v411
      %v414 = vunpack.c.l.s4 1983009808
      %v415 = vunpack.c.0.s8 %v414
      %v416 = vlaneseq
      %v417 = vshrl.u32 %v416, 7
      %v418 = vsub.s32 %v415, %v417
      %v419 = vrot.slane %v323, %v418
      %v421 = vunpack.c.l.s4 1983009808
      %v422 = vunpack.c.0.s8 %v421
      %v423 = vlaneseq
      %v424 = vshrl.u32 %v423, 7
      %v425 = vsub.s32 %v422, %v424
      %v426 = vrot.slane %v324, %v425
      %v428 = vunpack.c.l.s4 1983009808
      %v429 = vunpack.c.0.s8 %v428
      %v430 = vlaneseq
      %v431 = vshrl.u32 %v430, 7
      %v432 = vsub.s32 %v429, %v431
      %v433 = vrot.slane %v325, %v432
      %v435 = vunpack.c.l.s4 1983009808
      %v436 = vunpack.c.0.s8 %v435
      %v437 = vlaneseq
      %v438 = vshrl.u32 %v437, 7
      %v439 = vsub.s32 %v436, %v438
      %v440 = vrot.slane %v326, %v439
      %v442 = vunpack.c.l.s4 1983009808
      %v443 = vunpack.c.0.s8 %v442
      %v444 = vlaneseq
      %v445 = vshrl.u32 %v444, 7
      %v446 = vsub.s32 %v443, %v445
      %v447 = vrot.slane %v327, %v446
      %v448 = vunpack.c.l.b16 %v370
      %v449 = vunpack.c.l.b16 %v377
      %v450 = vunpack.c.l.b16 %v384
      %v451 = vunpack.c.l.b16 %v391
      %v452 = vunpack.c.l.b16 %v398
      %v453 = vunpack.c.l.b16 %v405
      %v454 = vunpack.c.l.b16 %v412
      %v455 = vunpack.c.l.b16 %v419
      %v456 = vunpack.c.l.b16 %v426
      %v457 = vunpack.c.l.b16 %v433
      %v458 = vunpack.c.l.b16 %v440
      %v459 = vunpack.c.l.b16 %v447
      %v460 = vrot.slane %v449, 7
      %vm461 = vcmask 1041409
      %v462 = vsel %vm461, %v460, %v448
      %v463 = vrot.slane %v450, 6
      %vm464 = vcmask 1042434
      %v465 = vsel %vm464, %v463, %v462
      %v466 = vrot.slane %v451, 5
      %vm467 = vcmask 1043459
      %v468 = vsel %vm467, %v466, %v465
      %v469 = vrot.slane %v452, 4
      %vm470 = vcmask 1044484
      %v471 = vsel %vm470, %v469, %v468
      %v472 = vrot.slane %v453, 3
      %vm473 = vcmask 1045509
      %v474 = vsel %vm473, %v472, %v471
      %v475 = vrot.slane %v454, 2
      %vm476 = vcmask 1046534
      %v477 = vsel %vm476, %v475, %v474
      %v478 = vrot.slane %v455, 1
      %vm479 = vcmask 1047559
      %v480 = vsel %vm479, %v478, %v477
      %v481 = vrot.slane %v457, 7
      %v482 = vsel %vm461, %v481, %v456
      %v483 = vrot.slane %v458, 6
      %v484 = vsel %vm464, %v483, %v482
      %v485 = vrot.slane %v459, 5
      %v486 = vsel %vm467, %v485, %v484
      %v487 = vpack.c.b16 %v486, %v480
      %v501 = vunpack.c.l.s4 1966171168
      %v502 = vunpack.c.0.s8 %v501
      %v503 = vlaneseq
      %v504 = vshrl.u32 %v503, 7
      %v505 = vsub.s32 %v502, %v504
      %v506 = vrot.slane %v328, %v505
      %v508 = vunpack.c.l.s4 1966171168
      %v509 = vunpack.c.0.s8 %v508
      %v510 = vlaneseq
      %v511 = vshrl.u32 %v510, 7
      %v512 = vsub.s32 %v509, %v511
      %v513 = vrot.slane %v506, %v512
      %v515 = vunpack.c.l.s4 1966171168
      %v516 = vunpack.c.0.s8 %v515
      %v517 = vlaneseq
      %v518 = vshrl.u32 %v517, 7
      %v519 = vsub.s32 %v516, %v518
      %v520 = vrot.slane %v329, %v519
      %v522 = vunpack.c.l.s4 1966171168
      %v523 = vunpack.c.0.s8 %v522
      %v524 = vlaneseq
      %v525 = vshrl.u32 %v524, 7
      %v526 = vsub.s32 %v523, %v525
      %v527 = vrot.slane %v520, %v526
      %v529 = vunpack.c.l.s4 1966171168
      %v530 = vunpack.c.0.s8 %v529
      %v531 = vlaneseq
      %v532 = vshrl.u32 %v531, 7
      %v533 = vsub.s32 %v530, %v532
      %v534 = vrot.slane %v330, %v533
      %v536 = vunpack.c.l.s4 1966171168
      %v537 = vunpack.c.0.s8 %v536
      %v538 = vlaneseq
      %v539 = vshrl.u32 %v538, 7
      %v540 = vsub.s32 %v537, %v539
      %v541 = vrot.slane %v534, %v540
      %v543 = vunpack.c.l.s4 1966171168
      %v544 = vunpack.c.0.s8 %v543
      %v545 = vlaneseq
      %v546 = vshrl.u32 %v545, 7
      %v547 = vsub.s32 %v544, %v546
      %v548 = vrot.slane %v331, %v547
      %v550 = vunpack.c.l.s4 1966171168
      %v551 = vunpack.c.0.s8 %v550
      %v552 = vlaneseq
      %v553 = vshrl.u32 %v552, 7
      %v554 = vsub.s32 %v551, %v553
      %v555 = vrot.slane %v548, %v554
      %v557 = vunpack.c.l.s4 1966171168
      %v558 = vunpack.c.0.s8 %v557
      %v559 = vlaneseq
      %v560 = vshrl.u32 %v559, 7
      %v561 = vsub.s32 %v558, %v560
      %v562 = vrot.slane %v332, %v561
      %v564 = vunpack.c.l.s4 1966171168
      %v565 = vunpack.c.0.s8 %v564
      %v566 = vlaneseq
      %v567 = vshrl.u32 %v566, 7
      %v568 = vsub.s32 %v565, %v567
      %v569 = vrot.slane %v562, %v568
      %v571 = vunpack.c.l.s4 1966171168
      %v572 = vunpack.c.0.s8 %v571
      %v573 = vlaneseq
      %v574 = vshrl.u32 %v573, 7
      %v575 = vsub.s32 %v572, %v574
      %v576 = vrot.slane %v333, %v575
      %v578 = vunpack.c.l.s4 1966171168
      %v579 = vunpack.c.0.s8 %v578
      %v580 = vlaneseq
      %v581 = vshrl.u32 %v580, 7
      %v582 = vsub.s32 %v579, %v581
      %v583 = vrot.slane %v576, %v582
      %v585 = vunpack.c.l.s4 1966171168
      %v586 = vunpack.c.0.s8 %v585
      %v587 = vlaneseq
      %v588 = vshrl.u32 %v587, 7
      %v589 = vsub.s32 %v586, %v588
      %v590 = vrot.slane %v334, %v589
      %v592 = vunpack.c.l.s4 1966171168
      %v593 = vunpack.c.0.s8 %v592
      %v594 = vlaneseq
      %v595 = vshrl.u32 %v594, 7
      %v596 = vsub.s32 %v593, %v595
      %v597 = vrot.slane %v590, %v596
      %v599 = vunpack.c.l.s4 1966171168
      %v600 = vunpack.c.0.s8 %v599
      %v601 = vlaneseq
      %v602 = vshrl.u32 %v601, 7
      %v603 = vsub.s32 %v600, %v602
      %v604 = vrot.slane %v335, %v603
      %v606 = vunpack.c.l.s4 1966171168
      %v607 = vunpack.c.0.s8 %v606
      %v608 = vlaneseq
      %v609 = vshrl.u32 %v608, 7
      %v610 = vsub.s32 %v607, %v609
      %v611 = vrot.slane %v604, %v610
      %v613 = vunpack.c.l.s4 1966171168
      %v614 = vunpack.c.0.s8 %v613
      %v615 = vlaneseq
      %v616 = vshrl.u32 %v615, 7
      %v617 = vsub.s32 %v614, %v616
      %v618 = vrot.slane %v336, %v617
      %v620 = vunpack.c.l.s4 1966171168
      %v621 = vunpack.c.0.s8 %v620
      %v622 = vlaneseq
      %v623 = vshrl.u32 %v622, 7
      %v624 = vsub.s32 %v621, %v623
      %v625 = vrot.slane %v618, %v624
      %v627 = vunpack.c.l.s4 1966171168
      %v628 = vunpack.c.0.s8 %v627
      %v629 = vlaneseq
      %v630 = vshrl.u32 %v629, 7
      %v631 = vsub.s32 %v628, %v630
      %v632 = vrot.slane %v337, %v631
      %v634 = vunpack.c.l.s4 1966171168
      %v635 = vunpack.c.0.s8 %v634
      %v636 = vlaneseq
      %v637 = vshrl.u32 %v636, 7
      %v638 = vsub.s32 %v635, %v637
      %v639 = vrot.slane %v632, %v638
      %v641 = vunpack.c.l.s4 1966171168
      %v642 = vunpack.c.0.s8 %v641
      %v643 = vlaneseq
      %v644 = vshrl.u32 %v643, 7
      %v645 = vsub.s32 %v642, %v644
      %v646 = vrot.slane %v338, %v645
      %v648 = vunpack.c.l.s4 1966171168
      %v649 = vunpack.c.0.s8 %v648
      %v650 = vlaneseq
      %v651 = vshrl.u32 %v650, 7
      %v652 = vsub.s32 %v649, %v651
      %v653 = vrot.slane %v646, %v652
      %v655 = vunpack.c.l.s4 1966171168
      %v656 = vunpack.c.0.s8 %v655
      %v657 = vlaneseq
      %v658 = vshrl.u32 %v657, 7
      %v659 = vsub.s32 %v656, %v658
      %v660 = vrot.slane %v339, %v659
      %v662 = vunpack.c.l.s4 1966171168
      %v663 = vunpack.c.0.s8 %v662
      %v664 = vlaneseq
      %v665 = vshrl.u32 %v664, 7
      %v666 = vsub.s32 %v663, %v665
      %v667 = vrot.slane %v660, %v666
      %v668 = vunpack.c.l.b16 %v513
      %v669 = vunpack.c.l.b16 %v527
      %v670 = vunpack.c.l.b16 %v541
      %v671 = vunpack.c.l.b16 %v555
      %v672 = vunpack.c.l.b16 %v569
      %v673 = vunpack.c.l.b16 %v583
      %v674 = vunpack.c.l.b16 %v597
      %v675 = vunpack.c.l.b16 %v611
      %v676 = vunpack.c.l.b16 %v625
      %v677 = vunpack.c.l.b16 %v639
      %v678 = vunpack.c.l.b16 %v653
      %v679 = vunpack.c.l.b16 %v667
      %v680 = vrot.slane %v669, 7
      %v681 = vsel %vm461, %v680, %v668
      %v682 = vrot.slane %v670, 6
      %v683 = vsel %vm464, %v682, %v681
      %v684 = vrot.slane %v671, 5
      %v685 = vsel %vm467, %v684, %v683
      %v686 = vrot.slane %v672, 4
      %v687 = vsel %vm470, %v686, %v685
      %v688 = vrot.slane %v673, 3
      %v689 = vsel %vm473, %v688, %v687
      %v690 = vrot.slane %v674, 2
      %v691 = vsel %vm476, %v690, %v689
      %v692 = vrot.slane %v675, 1
      %v693 = vsel %vm479, %v692, %v691
      %v694 = vrot.slane %v677, 7
      %v695 = vsel %vm461, %v694, %v676
      %v696 = vrot.slane %v678, 6
      %v697 = vsel %vm464, %v696, %v695
      %v698 = vrot.slane %v679, 5
      %v699 = vsel %vm467, %v698, %v697
      %v700 = vpack.c.b16 %v699, %v693
      %vm701 = vcmask 130048
      %v703 = vsel %vm701, %v487, 0
      %v706 = vsel %vm701, %v700, 0
      %708 = vmatprep.subr.bf16.mxu0 0
      %709 = vmatpush1.bf16.xpose.msra.mxu0 %v706
      %710 = vmatprep.subr.bf16.mxu0 0
      %711 = vmatpush1.bf16.xpose.msra.mxu0 0
      %712 = vmatprep.subr.bf16.mxu0 0
      %713 = vmatpush1.bf16.xpose.msra.mxu0 0
      %714 = vmatprep.subr.bf16.mxu0 0
      %715 = vmatpush1.bf16.xpose.msra.mxu0 0
      %716 = vmatprep.subr.bf16.mxu0 0
      %717 = vmatpush1.bf16.xpose.msra.mxu0 0
      %718 = vmatprep.subr.bf16.mxu0 0
      %719 = vmatpush1.bf16.xpose.msra.mxu0 0
      %720 = vmatprep.subr.bf16.mxu0 0
      %721 = vmatpush1.bf16.xpose.msra.mxu0 0
      %722 = vmatprep.subr.bf16.mxu0 0
      %723 = vmatpush1.bf16.xpose.msra.mxu0 0
      %724 = vmatprep.subr.bf16.mxu0 0
      %725 = vmatpush1.bf16.xpose.msra.mxu0 0
      %726 = vmatprep.subr.bf16.mxu0 0
      %727 = vmatpush1.bf16.xpose.msra.mxu0 0
      %728 = vmatprep.subr.bf16.mxu0 0
      %729 = vmatpush1.bf16.xpose.msra.mxu0 0
      %730 = vmatprep.subr.bf16.mxu0 0
      %731 = vmatpush1.bf16.xpose.msra.mxu0 0
      %732 = vmatprep.subr.bf16.mxu0 0
      %733 = vmatpush1.bf16.xpose.msra.mxu0 0
      %734 = vmatprep.subr.bf16.mxu0 0
      %735 = vmatpush1.bf16.xpose.msra.mxu0 0
      %736 = vmatprep.subr.bf16.mxu0 0
      %737 = vmatpush1.bf16.xpose.msra.mxu0 0
      %738 = vmatprep.subr.bf16.mxu0 0
      %739 = vmatpush1.bf16.xpose.msra.mxu0 0
      %740 = vmatprep.mubr.bf16.mxu0 0
      %741 = vmatmul.mubr.bf16.gmra.mrb[0].mxu0 %v703
      %v742 = vpop.f32.mrb[0].mxu0
      %v743 = vadd.f32 0.0, %v742
      %v744 = vpop.f32.mrb[0].mxu0
      %v745 = vpop.f32.mrb[0].mxu0
      %v746 = vadd.f32 0.0, %v745
      %v747 = vpop.f32.mrb[0].mxu0
      %748 = vdwg.mxu0
      %v749 = vmul.f32 %v743, 0.25
      %v750 = vmul.f32 %v746, 0.25
      %v751 = vld [vmem:[#allocation2] sm:$0xff]
      %v752 = vld [vmem:[#allocation2 + $0x8] sm:$0xf]
      %vm753 = vcmask 97280
      %v754 = vsel %vm753, %v749, -inf
      %755 = vmax.xlane.f32.xlu0 %v754
      %v756 = vpop.xlane.xlu0 %755
      %vm757 = vcmask 93184
      %v758 = vsel %vm757, %v750, -inf
      %759 = vmax.xlane.f32.xlu0 %v758
      %v760 = vpop.xlane.xlu0 %759
      %v761 = vmax.f32 %v751, %v756
      %v762 = vmax.f32 %v752, %v760
      %v763 = vsub.f32 %v751, %v761
      %v764 = vsub.f32 %v752, %v762
      %v765 = vmul.f32 %v763, 1.442695
      %v766 = vpow.pop %v765
      %v767 = vmul.f32 %v764, 1.442695
      %v768 = vpow.pop %v767
      %770 = vset.pattern.permute.xlu0 0
      %771 = vperm.xlu0 %770, %v761
      %v772 = vpop.permute.xlu0 %771
      %775 = vset.pattern.permute.xlu0 0
      %776 = vperm.xlu0 %775, %v762
      %v777 = vpop.permute.xlu0 %776
      %v779 = vsub.f32 %v749, %v772
      %v780 = vsub.f32 %v750, %v777
      %v781 = vmul.f32 %v779, 1.442695
      %v782 = vpow.pop %v781
      %v783 = vmul.f32 %v780, 1.442695
      %v784 = vpow.pop %v783
      %v785 = vld [vmem:[#allocation3] sm:$0xff]
      %v786 = vld [vmem:[#allocation3 + $0x8] sm:$0xf]
      %v787 = vmul.f32 %v766, %v785
      %v788 = vmul.f32 %v768, %v786
      %v789 = vsel %vm753, %v782, 0.0
      %790 = vadd.xlane.f32.xlu0 %v789
      %v791 = vpop.xlane.xlu0 %790
      %v792 = vsel %vm757, %v784, 0.0
      %793 = vadd.xlane.f32.xlu0 %v792
      %v794 = vpop.xlane.xlu0 %793
      %v795 = vadd.f32 %v787, %v791
      %v796 = vadd.f32 %v788, %v794
      %vm797 = vcmask 7168
      %798 = vst.msk [vmem:[#allocation3] sm:$0xff] %vm797, %v795
      %vm799 = vcmask 3072
      %800 = vst.msk [vmem:[#allocation3 + $0x8] sm:$0xf] %vm799, %v796
      %v801 = vld [vmem:[#allocation4] sm:$0xff]
      %v802 = vld [vmem:[#allocation4 + $0x8] sm:$0xf]
      %804 = vset.pattern.permute.xlu0 0
      %805 = vperm.xlu0 %804, %v766
      %v806 = vpop.permute.xlu0 %805
      %809 = vset.pattern.permute.xlu0 0
      %810 = vperm.xlu0 %809, %v768
      %v811 = vpop.permute.xlu0 %810
      %v813 = vmul.f32 %v806, %v801
      %v814 = vmul.f32 %v811, %v802
      %v815 = vpack.c.bf16 %v784, %v782
      %v829 = vunpack.c.l.s4 1966171168
      %v830 = vunpack.c.0.s8 %v829
      %v831 = vlaneseq
      %v832 = vshrl.u32 %v831, 7
      %v833 = vsub.s32 %v830, %v832
      %v834 = vrot.slane %v340, %v833
      %v836 = vunpack.c.l.s4 1966171168
      %v837 = vunpack.c.0.s8 %v836
      %v838 = vlaneseq
      %v839 = vshrl.u32 %v838, 7
      %v840 = vsub.s32 %v837, %v839
      %v841 = vrot.slane %v834, %v840
      %v843 = vunpack.c.l.s4 1966171168
      %v844 = vunpack.c.0.s8 %v843
      %v845 = vlaneseq
      %v846 = vshrl.u32 %v845, 7
      %v847 = vsub.s32 %v844, %v846
      %v848 = vrot.slane %v341, %v847
      %v850 = vunpack.c.l.s4 1966171168
      %v851 = vunpack.c.0.s8 %v850
      %v852 = vlaneseq
      %v853 = vshrl.u32 %v852, 7
      %v854 = vsub.s32 %v851, %v853
      %v855 = vrot.slane %v848, %v854
      %v857 = vunpack.c.l.s4 1966171168
      %v858 = vunpack.c.0.s8 %v857
      %v859 = vlaneseq
      %v860 = vshrl.u32 %v859, 7
      %v861 = vsub.s32 %v858, %v860
      %v862 = vrot.slane %v342, %v861
      %v864 = vunpack.c.l.s4 1966171168
      %v865 = vunpack.c.0.s8 %v864
      %v866 = vlaneseq
      %v867 = vshrl.u32 %v866, 7
      %v868 = vsub.s32 %v865, %v867
      %v869 = vrot.slane %v862, %v868
      %v871 = vunpack.c.l.s4 1966171168
      %v872 = vunpack.c.0.s8 %v871
      %v873 = vlaneseq
      %v874 = vshrl.u32 %v873, 7
      %v875 = vsub.s32 %v872, %v874
      %v876 = vrot.slane %v343, %v875
      %v878 = vunpack.c.l.s4 1966171168
      %v879 = vunpack.c.0.s8 %v878
      %v880 = vlaneseq
      %v881 = vshrl.u32 %v880, 7
      %v882 = vsub.s32 %v879, %v881
      %v883 = vrot.slane %v876, %v882
      %v885 = vunpack.c.l.s4 1966171168
      %v886 = vunpack.c.0.s8 %v885
      %v887 = vlaneseq
      %v888 = vshrl.u32 %v887, 7
      %v889 = vsub.s32 %v886, %v888
      %v890 = vrot.slane %v344, %v889
      %v892 = vunpack.c.l.s4 1966171168
      %v893 = vunpack.c.0.s8 %v892
      %v894 = vlaneseq
      %v895 = vshrl.u32 %v894, 7
      %v896 = vsub.s32 %v893, %v895
      %v897 = vrot.slane %v890, %v896
      %v899 = vunpack.c.l.s4 1966171168
      %v900 = vunpack.c.0.s8 %v899
      %v901 = vlaneseq
      %v902 = vshrl.u32 %v901, 7
      %v903 = vsub.s32 %v900, %v902
      %v904 = vrot.slane %v345, %v903
      %v906 = vunpack.c.l.s4 1966171168
      %v907 = vunpack.c.0.s8 %v906
      %v908 = vlaneseq
      %v909 = vshrl.u32 %v908, 7
      %v910 = vsub.s32 %v907, %v909
      %v911 = vrot.slane %v904, %v910
      %v913 = vunpack.c.l.s4 1966171168
      %v914 = vunpack.c.0.s8 %v913
      %v915 = vlaneseq
      %v916 = vshrl.u32 %v915, 7
      %v917 = vsub.s32 %v914, %v916
      %v918 = vrot.slane %v346, %v917
      %v920 = vunpack.c.l.s4 1966171168
      %v921 = vunpack.c.0.s8 %v920
      %v922 = vlaneseq
      %v923 = vshrl.u32 %v922, 7
      %v924 = vsub.s32 %v921, %v923
      %v925 = vrot.slane %v918, %v924
      %v927 = vunpack.c.l.s4 1966171168
      %v928 = vunpack.c.0.s8 %v927
      %v929 = vlaneseq
      %v930 = vshrl.u32 %v929, 7
      %v931 = vsub.s32 %v928, %v930
      %v932 = vrot.slane %v347, %v931
      %v934 = vunpack.c.l.s4 1966171168
      %v935 = vunpack.c.0.s8 %v934
      %v936 = vlaneseq
      %v937 = vshrl.u32 %v936, 7
      %v938 = vsub.s32 %v935, %v937
      %v939 = vrot.slane %v932, %v938
      %v941 = vunpack.c.l.s4 1966171168
      %v942 = vunpack.c.0.s8 %v941
      %v943 = vlaneseq
      %v944 = vshrl.u32 %v943, 7
      %v945 = vsub.s32 %v942, %v944
      %v946 = vrot.slane %v348, %v945
      %v948 = vunpack.c.l.s4 1966171168
      %v949 = vunpack.c.0.s8 %v948
      %v950 = vlaneseq
      %v951 = vshrl.u32 %v950, 7
      %v952 = vsub.s32 %v949, %v951
      %v953 = vrot.slane %v946, %v952
      %v955 = vunpack.c.l.s4 1966171168
      %v956 = vunpack.c.0.s8 %v955
      %v957 = vlaneseq
      %v958 = vshrl.u32 %v957, 7
      %v959 = vsub.s32 %v956, %v958
      %v960 = vrot.slane %v349, %v959
      %v962 = vunpack.c.l.s4 1966171168
      %v963 = vunpack.c.0.s8 %v962
      %v964 = vlaneseq
      %v965 = vshrl.u32 %v964, 7
      %v966 = vsub.s32 %v963, %v965
      %v967 = vrot.slane %v960, %v966
      %v969 = vunpack.c.l.s4 1966171168
      %v970 = vunpack.c.0.s8 %v969
      %v971 = vlaneseq
      %v972 = vshrl.u32 %v971, 7
      %v973 = vsub.s32 %v970, %v972
      %v974 = vrot.slane %v350, %v973
      %v976 = vunpack.c.l.s4 1966171168
      %v977 = vunpack.c.0.s8 %v976
      %v978 = vlaneseq
      %v979 = vshrl.u32 %v978, 7
      %v980 = vsub.s32 %v977, %v979
      %v981 = vrot.slane %v974, %v980
      %v983 = vunpack.c.l.s4 1966171168
      %v984 = vunpack.c.0.s8 %v983
      %v985 = vlaneseq
      %v986 = vshrl.u32 %v985, 7
      %v987 = vsub.s32 %v984, %v986
      %v988 = vrot.slane %v351, %v987
      %v990 = vunpack.c.l.s4 1966171168
      %v991 = vunpack.c.0.s8 %v990
      %v992 = vlaneseq
      %v993 = vshrl.u32 %v992, 7
      %v994 = vsub.s32 %v991, %v993
      %v995 = vrot.slane %v988, %v994
      %v996 = vunpack.c.l.b16 %v841
      %v997 = vunpack.c.l.b16 %v855
      %v998 = vunpack.c.l.b16 %v869
      %v999 = vunpack.c.l.b16 %v883
      %v1000 = vunpack.c.l.b16 %v897
      %v1001 = vunpack.c.l.b16 %v911
      %v1002 = vunpack.c.l.b16 %v925
      %v1003 = vunpack.c.l.b16 %v939
      %v1004 = vunpack.c.l.b16 %v953
      %v1005 = vunpack.c.l.b16 %v967
      %v1006 = vunpack.c.l.b16 %v981
      %v1007 = vunpack.c.l.b16 %v995
      %v1008 = vrot.slane %v997, 7
      %v1009 = vsel %vm461, %v1008, %v996
      %v1010 = vrot.slane %v998, 6
      %v1011 = vsel %vm464, %v1010, %v1009
      %v1012 = vrot.slane %v999, 5
      %v1013 = vsel %vm467, %v1012, %v1011
      %v1014 = vrot.slane %v1000, 4
      %v1015 = vsel %vm470, %v1014, %v1013
      %v1016 = vrot.slane %v1001, 3
      %v1017 = vsel %vm473, %v1016, %v1015
      %v1018 = vrot.slane %v1002, 2
      %v1019 = vsel %vm476, %v1018, %v1017
      %v1020 = vrot.slane %v1003, 1
      %v1021 = vsel %vm479, %v1020, %v1019
      %v1022 = vrot.slane %v1005, 7
      %v1023 = vsel %vm461, %v1022, %v1004
      %v1024 = vrot.slane %v1006, 6
      %v1025 = vsel %vm464, %v1024, %v1023
      %v1026 = vrot.slane %v1007, 5
      %v1027 = vsel %vm467, %v1026, %v1025
      %v1028 = vpack.c.b16 %v1027, %v1021
      %v1030 = vsel %vm753, %v815, 0
      %vm1032 = vcmask 1045504
      %v1034 = vsel %vm1032, %v1028, 0
      %1036 = vmatprep.subr.bf16.mxu0 0
      %1037 = vmatpush1.bf16.msra.mxu0 %v1034
      %1038 = vmatprep.subr.bf16.mxu0 0
      %1039 = vmatpush1.bf16.msra.mxu0 0
      %1040 = vmatprep.subr.bf16.mxu0 0
      %1041 = vmatpush1.bf16.msra.mxu0 0
      %1042 = vmatprep.subr.bf16.mxu0 0
      %1043 = vmatpush1.bf16.msra.mxu0 0
      %1044 = vmatprep.subr.bf16.mxu0 0
      %1045 = vmatpush1.bf16.msra.mxu0 0
      %1046 = vmatprep.subr.bf16.mxu0 0
      %1047 = vmatpush1.bf16.msra.mxu0 0
      %1048 = vmatprep.subr.bf16.mxu0 0
      %1049 = vmatpush1.bf16.msra.mxu0 0
      %1050 = vmatprep.subr.bf16.mxu0 0
      %1051 = vmatpush1.bf16.msra.mxu0 0
      %1052 = vmatprep.subr.bf16.mxu0 0
      %1053 = vmatpush1.bf16.msra.mxu0 0
      %1054 = vmatprep.subr.bf16.mxu0 0
      %1055 = vmatpush1.bf16.msra.mxu0 0
      %1056 = vmatprep.subr.bf16.mxu0 0
      %1057 = vmatpush1.bf16.msra.mxu0 0
      %1058 = vmatprep.subr.bf16.mxu0 0
      %1059 = vmatpush1.bf16.msra.mxu0 0
      %1060 = vmatprep.subr.bf16.mxu0 0
      %1061 = vmatpush1.bf16.msra.mxu0 0
      %1062 = vmatprep.subr.bf16.mxu0 0
      %1063 = vmatpush1.bf16.msra.mxu0 0
      %1064 = vmatprep.subr.bf16.mxu0 0
      %1065 = vmatpush1.bf16.msra.mxu0 0
      %1066 = vmatprep.subr.bf16.mxu0 0
      %1067 = vmatpush1.bf16.msra.mxu0 0
      %1068 = vmatprep.mubr.bf16.mxu0 0
      %1069 = vmatmul.mubr.bf16.gmra.mrb[0].mxu0 %v1030
      %v1070 = vpop.f32.mrb[0].mxu0
      %v1071 = vadd.f32 0.0, %v1070
      %v1072 = vpop.f32.mrb[0].mxu0
      %v1073 = vpop.f32.mrb[0].mxu0
      %v1074 = vadd.f32 0.0, %v1073
      %v1075 = vpop.f32.mrb[0].mxu0
      %1076 = vdwg.mxu0
      %v1077 = vadd.f32 %v813, %v1071
      %v1078 = vadd.f32 %v814, %v1074
      %1079 = vst.msk [vmem:[#allocation4] sm:$0xff] %vm701, %v1077
      %vm1080 = vcmask 125952
      %1081 = vst.msk [vmem:[#allocation4 + $0x8] sm:$0xf] %vm1080, %v1078
      %1082 = vst.msk [vmem:[#allocation2] sm:$0xff] %vm797, %v761
      %1083 = vst.msk [vmem:[#allocation2 + $0x8] sm:$0xf] %vm799, %v762
      %v1084 = vrot.slane %v448, 1
      %v1085 = vsel %vm461, %v449, %v1084
      %v1086 = vrot.slane %v450, 7
      %v1087 = vsel %vm464, %v1086, %v1085
      %v1088 = vrot.slane %v451, 6
      %v1089 = vsel %vm467, %v1088, %v1087
      %v1090 = vrot.slane %v452, 5
      %v1091 = vsel %vm470, %v1090, %v1089
      %v1092 = vrot.slane %v453, 4
      %v1093 = vsel %vm473, %v1092, %v1091
      %v1094 = vrot.slane %v454, 3
      %v1095 = vsel %vm476, %v1094, %v1093
      %v1096 = vrot.slane %v455, 2
      %v1097 = vsel %vm479, %v1096, %v1095
      %v1098 = vrot.slane %v456, 1
      %v1099 = vsel %vm461, %v457, %v1098
      %v1100 = vrot.slane %v458, 7
      %v1101 = vsel %vm464, %v1100, %v1099
      %v1102 = vrot.slane %v459, 6
      %v1103 = vsel %vm467, %v1102, %v1101
      %v1104 = vpack.c.b16 %v1103, %v1097
      %v1106 = vsel %vm701, %v1104, 0
      %1108 = vmatprep.subr.bf16.mxu0 0
      %1109 = vmatpush1.bf16.xpose.msra.mxu0 %v706
      %1110 = vmatprep.subr.bf16.mxu0 0
      %1111 = vmatpush1.bf16.xpose.msra.mxu0 0
      %1112 = vmatprep.subr.bf16.mxu0 0
      %1113 = vmatpush1.bf16.xpose.msra.mxu0 0
      %1114 = vmatprep.subr.bf16.mxu0 0
      %1115 = vmatpush1.bf16.xpose.msra.mxu0 0
      %1116 = vmatprep.subr.bf16.mxu0 0
      %1117 = vmatpush1.bf16.xpose.msra.mxu0 0
      %1118 = vmatprep.subr.bf16.mxu0 0
      %1119 = vmatpush1.bf16.xpose.msra.mxu0 0
      %1120 = vmatprep.subr.bf16.mxu0 0
      %1121 = vmatpush1.bf16.xpose.msra.mxu0 0
      %1122 = vmatprep.subr.bf16.mxu0 0
      %1123 = vmatpush1.bf16.xpose.msra.mxu0 0
      %1124 = vmatprep.subr.bf16.mxu0 0
      %1125 = vmatpush1.bf16.xpose.msra.mxu0 0
      %1126 = vmatprep.subr.bf16.mxu0 0
      %1127 = vmatpush1.bf16.xpose.msra.mxu0 0
      %1128 = vmatprep.subr.bf16.mxu0 0
      %1129 = vmatpush1.bf16.xpose.msra.mxu0 0
      %1130 = vmatprep.subr.bf16.mxu0 0
      %1131 = vmatpush1.bf16.xpose.msra.mxu0 0
      %1132 = vmatprep.subr.bf16.mxu0 0
      %1133 = vmatpush1.bf16.xpose.msra.mxu0 0
      %1134 = vmatprep.subr.bf16.mxu0 0
      %1135 = vmatpush1.bf16.xpose.msra.mxu0 0
      %1136 = vmatprep.subr.bf16.mxu0 0
      %1137 = vmatpush1.bf16.xpose.msra.mxu0 0
      %1138 = vmatprep.subr.bf16.mxu0 0
      %1139 = vmatpush1.bf16.xpose.msra.mxu0 0
      %1140 = vmatprep.mubr.bf16.mxu0 0
      %1141 = vmatmul.mubr.bf16.gmra.mrb[0].mxu0 %v1106
      %v1142 = vpop.f32.mrb[0].mxu0
      %v1143 = vadd.f32 0.0, %v1142
      %v1144 = vpop.f32.mrb[0].mxu0
      %v1145 = vpop.f32.mrb[0].mxu0
      %v1146 = vadd.f32 0.0, %v1145
      %v1147 = vpop.f32.mrb[0].mxu0
      %1148 = vdwg.mxu0
      %v1149 = vmul.f32 %v1143, 0.25
      %v1150 = vmul.f32 %v1146, 0.25
      %s1151 = scalar_lea.vmem [#allocation2], 16
      %v1152 = vld [vmem:[%s1151] sm:$0xff]
      %v1153 = vld [vmem:[%s1151 + $0x8] sm:$0xf]
      %v1154 = vsel %vm753, %v1149, -inf
      %1155 = vmax.xlane.f32.xlu0 %v1154
      %v1156 = vpop.xlane.xlu0 %1155
      %v1157 = vsel %vm757, %v1150, -inf
      %1158 = vmax.xlane.f32.xlu0 %v1157
      %v1159 = vpop.xlane.xlu0 %1158
      %v1160 = vmax.f32 %v1152, %v1156
      %v1161 = vmax.f32 %v1153, %v1159
      %v1162 = vsub.f32 %v1152, %v1160
      %v1163 = vsub.f32 %v1153, %v1161
      %v1164 = vmul.f32 %v1162, 1.442695
      %v1165 = vpow.pop %v1164
      %v1166 = vmul.f32 %v1163, 1.442695
      %v1167 = vpow.pop %v1166
      %1169 = vset.pattern.permute.xlu0 0
      %1170 = vperm.xlu0 %1169, %v1160
      %v1171 = vpop.permute.xlu0 %1170
      %1174 = vset.pattern.permute.xlu0 0
      %1175 = vperm.xlu0 %1174, %v1161
      %v1176 = vpop.permute.xlu0 %1175
      %v1178 = vsub.f32 %v1149, %v1171
      %v1179 = vsub.f32 %v1150, %v1176
      %v1180 = vmul.f32 %v1178, 1.442695
      %v1181 = vpow.pop %v1180
      %v1182 = vmul.f32 %v1179, 1.442695
      %v1183 = vpow.pop %v1182
      %s1184 = scalar_lea.vmem [#allocation3], 16
      %v1185 = vld [vmem:[%s1184] sm:$0xff]
      %v1186 = vld [vmem:[%s1184 + $0x8] sm:$0xf]
      %v1187 = vmul.f32 %v1165, %v1185
      %v1188 = vmul.f32 %v1167, %v1186
      %v1189 = vsel %vm753, %v1181, 0.0
      %1190 = vadd.xlane.f32.xlu0 %v1189
      %v1191 = vpop.xlane.xlu0 %1190
      %v1192 = vsel %vm757, %v1183, 0.0
      %1193 = vadd.xlane.f32.xlu0 %v1192
      %v1194 = vpop.xlane.xlu0 %1193
      %v1195 = vadd.f32 %v1187, %v1191
      %v1196 = vadd.f32 %v1188, %v1194
      %1197 = vst.msk [vmem:[%s1184] sm:$0xff] %vm797, %v1195
      %1198 = vst.msk [vmem:[%s1184 + $0x8] sm:$0xf] %vm799, %v1196
      %s1199 = scalar_lea.vmem [#allocation4], 16
      %v1200 = vld [vmem:[%s1199] sm:$0xff]
      %v1201 = vld [vmem:[%s1199 + $0x8] sm:$0xf]
      %1203 = vset.pattern.permute.xlu0 0
      %1204 = vperm.xlu0 %1203, %v1165
      %v1205 = vpop.permute.xlu0 %1204
      %1208 = vset.pattern.permute.xlu0 0
      %1209 = vperm.xlu0 %1208, %v1167
      %v1210 = vpop.permute.xlu0 %1209
      %v1212 = vmul.f32 %v1205, %v1200
      %v1213 = vmul.f32 %v1210, %v1201
      %v1214 = vpack.c.bf16 %v1183, %v1181
      %v1216 = vsel %vm753, %v1214, 0
      %1218 = vmatprep.subr.bf16.mxu0 0
      %1219 = vmatpush1.bf16.msra.mxu0 %v1034
      %1220 = vmatprep.subr.bf16.mxu0 0
      %1221 = vmatpush1.bf16.msra.mxu0 0
      %1222 = vmatprep.subr.bf16.mxu0 0
      %1223 = vmatpush1.bf16.msra.mxu0 0
      %1224 = vmatprep.subr.bf16.mxu0 0
      %1225 = vmatpush1.bf16.msra.mxu0 0
      %1226 = vmatprep.subr.bf16.mxu0 0
      %1227 = vmatpush1.bf16.msra.mxu0 0
      %1228 = vmatprep.subr.bf16.mxu0 0
      %1229 = vmatpush1.bf16.msra.mxu0 0
      %1230 = vmatprep.subr.bf16.mxu0 0
      %1231 = vmatpush1.bf16.msra.mxu0 0
      %1232 = vmatprep.subr.bf16.mxu0 0
      %1233 = vmatpush1.bf16.msra.mxu0 0
      %1234 = vmatprep.subr.bf16.mxu0 0
      %1235 = vmatpush1.bf16.msra.mxu0 0
      %1236 = vmatprep.subr.bf16.mxu0 0
      %1237 = vmatpush1.bf16.msra.mxu0 0
      %1238 = vmatprep.subr.bf16.mxu0 0
      %1239 = vmatpush1.bf16.msra.mxu0 0
      %1240 = vmatprep.subr.bf16.mxu0 0
      %1241 = vmatpush1.bf16.msra.mxu0 0
      %1242 = vmatprep.subr.bf16.mxu0 0
      %1243 = vmatpush1.bf16.msra.mxu0 0
      %1244 = vmatprep.subr.bf16.mxu0 0
      %1245 = vmatpush1.bf16.msra.mxu0 0
      %1246 = vmatprep.subr.bf16.mxu0 0
      %1247 = vmatpush1.bf16.msra.mxu0 0
      %1248 = vmatprep.subr.bf16.mxu0 0
      %1249 = vmatpush1.bf16.msra.mxu0 0
      %1250 = vmatprep.mubr.bf16.mxu0 0
      %1251 = vmatmul.mubr.bf16.gmra.mrb[0].mxu0 %v1216
      %v1252 = vpop.f32.mrb[0].mxu0
      %v1253 = vadd.f32 0.0, %v1252
      %v1254 = vpop.f32.mrb[0].mxu0
      %v1255 = vpop.f32.mrb[0].mxu0
      %v1256 = vadd.f32 0.0, %v1255
      %v1257 = vpop.f32.mrb[0].mxu0
      %1258 = vdwg.mxu0
      %v1259 = vadd.f32 %v1212, %v1253
      %v1260 = vadd.f32 %v1213, %v1256
      %1261 = vst.msk [vmem:[%s1199] sm:$0xff] %vm701, %v1259
      %1262 = vst.msk [vmem:[%s1199 + $0x8] sm:$0xf] %vm1080, %v1260
      %1263 = vst.msk [vmem:[%s1151] sm:$0xff] %vm797, %v1160
      %1264 = vst.msk [vmem:[%s1151 + $0x8] sm:$0xf] %vm799, %v1161
      %v1265 = vrot.slane %v448, 2
      %v1266 = vrot.slane %v449, 1
      %v1267 = vsel %vm461, %v1266, %v1265
      %v1268 = vsel %vm464, %v450, %v1267
      %v1269 = vrot.slane %v451, 7
      %v1270 = vsel %vm467, %v1269, %v1268
      %v1271 = vrot.slane %v452, 6
      %v1272 = vsel %vm470, %v1271, %v1270
      %v1273 = vrot.slane %v453, 5
      %v1274 = vsel %vm473, %v1273, %v1272
      %v1275 = vrot.slane %v454, 4
      %v1276 = vsel %vm476, %v1275, %v1274
      %v1277 = vrot.slane %v455, 3
      %v1278 = vsel %vm479, %v1277, %v1276
      %v1279 = vrot.slane %v456, 2
      %v1280 = vrot.slane %v457, 1
      %v1281 = vsel %vm461, %v1280, %v1279
      %v1282 = vsel %vm464, %v458, %v1281
      %v1283 = vrot.slane %v459, 7
      %v1284 = vsel %vm467, %v1283, %v1282
      %v1285 = vpack.c.b16 %v1284, %v1278
      %v1286 = vrot.slane %v668, 1
      %v1287 = vsel %vm461, %v669, %v1286
      %v1288 = vrot.slane %v670, 7
      %v1289 = vsel %vm464, %v1288, %v1287
      %v1290 = vrot.slane %v671, 6
      %v1291 = vsel %vm467, %v1290, %v1289
      %v1292 = vrot.slane %v672, 5
      %v1293 = vsel %vm470, %v1292, %v1291
      %v1294 = vrot.slane %v673, 4
      %v1295 = vsel %vm473, %v1294, %v1293
      %v1296 = vrot.slane %v674, 3
      %v1297 = vsel %vm476, %v1296, %v1295
      %v1298 = vrot.slane %v675, 2
      %v1299 = vsel %vm479, %v1298, %v1297
      %v1300 = vrot.slane %v676, 1
      %v1301 = vsel %vm461, %v677, %v1300
      %v1302 = vrot.slane %v678, 7
      %v1303 = vsel %vm464, %v1302, %v1301
      %v1304 = vrot.slane %v679, 6
      %v1305 = vsel %vm467, %v1304, %v1303
      %v1306 = vpack.c.b16 %v1305, %v1299
      %v1308 = vsel %vm701, %v1285, 0
      %v1311 = vsel %vm701, %v1306, 0
      %1313 = vmatprep.subr.bf16.mxu0 0
      %1314 = vmatpush1.bf16.xpose.msra.mxu0 %v1311
      %1315 = vmatprep.subr.bf16.mxu0 0
      %1316 = vmatpush1.bf16.xpose.msra.mxu0 0
      %1317 = vmatprep.subr.bf16.mxu0 0
      %1318 = vmatpush1.bf16.xpose.msra.mxu0 0
      %1319 = vmatprep.subr.bf16.mxu0 0
      %1320 = vmatpush1.bf16.xpose.msra.mxu0 0
      %1321 = vmatprep.subr.bf16.mxu0 0
      %1322 = vmatpush1.bf16.xpose.msra.mxu0 0
      %1323 = vmatprep.subr.bf16.mxu0 0
      %1324 = vmatpush1.bf16.xpose.msra.mxu0 0
      %1325 = vmatprep.subr.bf16.mxu0 0
      %1326 = vmatpush1.bf16.xpose.msra.mxu0 0
      %1327 = vmatprep.subr.bf16.mxu0 0
      %1328 = vmatpush1.bf16.xpose.msra.mxu0 0
      %1329 = vmatprep.subr.bf16.mxu0 0
      %1330 = vmatpush1.bf16.xpose.msra.mxu0 0
      %1331 = vmatprep.subr.bf16.mxu0 0
      %1332 = vmatpush1.bf16.xpose.msra.mxu0 0
      %1333 = vmatprep.subr.bf16.mxu0 0
      %1334 = vmatpush1.bf16.xpose.msra.mxu0 0
      %1335 = vmatprep.subr.bf16.mxu0 0
      %1336 = vmatpush1.bf16.xpose.msra.mxu0 0
      %1337 = vmatprep.subr.bf16.mxu0 0
      %1338 = vmatpush1.bf16.xpose.msra.mxu0 0
      %1339 = vmatprep.subr.bf16.mxu0 0
      %1340 = vmatpush1.bf16.xpose.msra.mxu0 0
      %1341 = vmatprep.subr.bf16.mxu0 0
      %1342 = vmatpush1.bf16.xpose.msra.mxu0 0
      %1343 = vmatprep.subr.bf16.mxu0 0
      %1344 = vmatpush1.bf16.xpose.msra.mxu0 0
      %1345 = vmatprep.mubr.bf16.mxu0 0
      %1346 = vmatmul.mubr.bf16.gmra.mrb[0].mxu0 %v1308
      %v1347 = vpop.f32.mrb[0].mxu0
      %v1348 = vadd.f32 0.0, %v1347
      %v1349 = vpop.f32.mrb[0].mxu0
      %v1350 = vpop.f32.mrb[0].mxu0
      %v1351 = vadd.f32 0.0, %v1350
      %v1352 = vpop.f32.mrb[0].mxu0
      %1353 = vdwg.mxu0
      %v1354 = vmul.f32 %v1348, 0.25
      %v1355 = vmul.f32 %v1351, 0.25
      %s1356 = scalar_lea.vmem [#allocation2], 32
      %v1357 = vld [vmem:[%s1356] sm:$0xff]
      %v1358 = vld [vmem:[%s1356 + $0x8] sm:$0xf]
      %v1359 = vsel %vm753, %v1354, -inf
      %1360 = vmax.xlane.f32.xlu0 %v1359
      %v1361 = vpop.xlane.xlu0 %1360
      %v1362 = vsel %vm757, %v1355, -inf
      %1363 = vmax.xlane.f32.xlu0 %v1362
      %v1364 = vpop.xlane.xlu0 %1363
      %v1365 = vmax.f32 %v1357, %v1361
      %v1366 = vmax.f32 %v1358, %v1364
      %v1367 = vsub.f32 %v1357, %v1365
      %v1368 = vsub.f32 %v1358, %v1366
      %v1369 = vmul.f32 %v1367, 1.442695
      %v1370 = vpow.pop %v1369
      %v1371 = vmul.f32 %v1368, 1.442695
      %v1372 = vpow.pop %v1371
      %1374 = vset.pattern.permute.xlu0 0
      %1375 = vperm.xlu0 %1374, %v1365
      %v1376 = vpop.permute.xlu0 %1375
      %1379 = vset.pattern.permute.xlu0 0
      %1380 = vperm.xlu0 %1379, %v1366
      %v1381 = vpop.permute.xlu0 %1380
      %v1383 = vsub.f32 %v1354, %v1376
      %v1384 = vsub.f32 %v1355, %v1381
      %v1385 = vmul.f32 %v1383, 1.442695
      %v1386 = vpow.pop %v1385
      %v1387 = vmul.f32 %v1384, 1.442695
      %v1388 = vpow.pop %v1387
      %s1389 = scalar_lea.vmem [#allocation3], 32
      %v1390 = vld [vmem:[%s1389] sm:$0xff]
      %v1391 = vld [vmem:[%s1389 + $0x8] sm:$0xf]
      %v1392 = vmul.f32 %v1370, %v1390
      %v1393 = vmul.f32 %v1372, %v1391
      %v1394 = vsel %vm753, %v1386, 0.0
      %1395 = vadd.xlane.f32.xlu0 %v1394
      %v1396 = vpop.xlane.xlu0 %1395
      %v1397 = vsel %vm757, %v1388, 0.0
      %1398 = vadd.xlane.f32.xlu0 %v1397
      %v1399 = vpop.xlane.xlu0 %1398
      %v1400 = vadd.f32 %v1392, %v1396
      %v1401 = vadd.f32 %v1393, %v1399
      %1402 = vst.msk [vmem:[%s1389] sm:$0xff] %vm797, %v1400
      %1403 = vst.msk [vmem:[%s1389 + $0x8] sm:$0xf] %vm799, %v1401
      %s1404 = scalar_lea.vmem [#allocation4], 32
      %v1405 = vld [vmem:[%s1404] sm:$0xff]
      %v1406 = vld [vmem:[%s1404 + $0x8] sm:$0xf]
      %1408 = vset.pattern.permute.xlu0 0
      %1409 = vperm.xlu0 %1408, %v1370
      %v1410 = vpop.permute.xlu0 %1409
      %1413 = vset.pattern.permute.xlu0 0
      %1414 = vperm.xlu0 %1413, %v1372
      %v1415 = vpop.permute.xlu0 %1414
      %v1417 = vmul.f32 %v1410, %v1405
      %v1418 = vmul.f32 %v1415, %v1406
      %v1419 = vpack.c.bf16 %v1388, %v1386
      %v1420 = vrot.slane %v996, 1
      %v1421 = vsel %vm461, %v997, %v1420
      %v1422 = vrot.slane %v998, 7
      %v1423 = vsel %vm464, %v1422, %v1421
      %v1424 = vrot.slane %v999, 6
      %v1425 = vsel %vm467, %v1424, %v1423
      %v1426 = vrot.slane %v1000, 5
      %v1427 = vsel %vm470, %v1426, %v1425
      %v1428 = vrot.slane %v1001, 4
      %v1429 = vsel %vm473, %v1428, %v1427
      %v1430 = vrot.slane %v1002, 3
      %v1431 = vsel %vm476, %v1430, %v1429
      %v1432 = vrot.slane %v1003, 2
      %v1433 = vsel %vm479, %v1432, %v1431
      %v1434 = vrot.slane %v1004, 1
      %v1435 = vsel %vm461, %v1005, %v1434
      %v1436 = vrot.slane %v1006, 7
      %v1437 = vsel %vm464, %v1436, %v1435
      %v1438 = vrot.slane %v1007, 6
      %v1439 = vsel %vm467, %v1438, %v1437
      %v1440 = vpack.c.b16 %v1439, %v1433
      %v1442 = vsel %vm753, %v1419, 0
      %v1445 = vsel %vm1032, %v1440, 0
      %1447 = vmatprep.subr.bf16.mxu0 0
      %1448 = vmatpush1.bf16.msra.mxu0 %v1445
      %1449 = vmatprep.subr.bf16.mxu0 0
      %1450 = vmatpush1.bf16.msra.mxu0 0
      %1451 = vmatprep.subr.bf16.mxu0 0
      %1452 = vmatpush1.bf16.msra.mxu0 0
      %1453 = vmatprep.subr.bf16.mxu0 0
      %1454 = vmatpush1.bf16.msra.mxu0 0
      %1455 = vmatprep.subr.bf16.mxu0 0
      %1456 = vmatpush1.bf16.msra.mxu0 0
      %1457 = vmatprep.subr.bf16.mxu0 0
      %1458 = vmatpush1.bf16.msra.mxu0 0
      %1459 = vmatprep.subr.bf16.mxu0 0
      %1460 = vmatpush1.bf16.msra.mxu0 0
      %1461 = vmatprep.subr.bf16.mxu0 0
      %1462 = vmatpush1.bf16.msra.mxu0 0
      %1463 = vmatprep.subr.bf16.mxu0 0
      %1464 = vmatpush1.bf16.msra.mxu0 0
      %1465 = vmatprep.subr.bf16.mxu0 0
      %1466 = vmatpush1.bf16.msra.mxu0 0
      %1467 = vmatprep.subr.bf16.mxu0 0
      %1468 = vmatpush1.bf16.msra.mxu0 0
      %1469 = vmatprep.subr.bf16.mxu0 0
      %1470 = vmatpush1.bf16.msra.mxu0 0
      %1471 = vmatprep.subr.bf16.mxu0 0
      %1472 = vmatpush1.bf16.msra.mxu0 0
      %1473 = vmatprep.subr.bf16.mxu0 0
      %1474 = vmatpush1.bf16.msra.mxu0 0
      %1475 = vmatprep.subr.bf16.mxu0 0
      %1476 = vmatpush1.bf16.msra.mxu0 0
      %1477 = vmatprep.subr.bf16.mxu0 0
      %1478 = vmatpush1.bf16.msra.mxu0 0
      %1479 = vmatprep.mubr.bf16.mxu0 0
      %1480 = vmatmul.mubr.bf16.gmra.mrb[0].mxu0 %v1442
      %v1481 = vpop.f32.mrb[0].mxu0
      %v1482 = vadd.f32 0.0, %v1481
      %v1483 = vpop.f32.mrb[0].mxu0
      %v1484 = vpop.f32.mrb[0].mxu0
      %v1485 = vadd.f32 0.0, %v1484
      %v1486 = vpop.f32.mrb[0].mxu0
      %1487 = vdwg.mxu0
      %v1488 = vadd.f32 %v1417, %v1482
      %v1489 = vadd.f32 %v1418, %v1485
      %1490 = vst.msk [vmem:[%s1404] sm:$0xff] %vm701, %v1488
      %1491 = vst.msk [vmem:[%s1404 + $0x8] sm:$0xf] %vm1080, %v1489
      %1492 = vst.msk [vmem:[%s1356] sm:$0xff] %vm797, %v1365
      %1493 = vst.msk [vmem:[%s1356 + $0x8] sm:$0xf] %vm799, %v1366
      %v1494 = vrot.slane %v448, 3
      %v1495 = vrot.slane %v449, 2
      %v1496 = vsel %vm461, %v1495, %v1494
      %v1497 = vrot.slane %v450, 1
      %v1498 = vsel %vm464, %v1497, %v1496
      %v1499 = vsel %vm467, %v451, %v1498
      %v1500 = vrot.slane %v452, 7
      %v1501 = vsel %vm470, %v1500, %v1499
      %v1502 = vrot.slane %v453, 6
      %v1503 = vsel %vm473, %v1502, %v1501
      %v1504 = vrot.slane %v454, 5
      %v1505 = vsel %vm476, %v1504, %v1503
      %v1506 = vrot.slane %v455, 4
      %v1507 = vsel %vm479, %v1506, %v1505
      %v1508 = vrot.slane %v456, 3
      %v1509 = vrot.slane %v457, 2
      %v1510 = vsel %vm461, %v1509, %v1508
      %v1511 = vrot.slane %v458, 1
      %v1512 = vsel %vm464, %v1511, %v1510
      %v1513 = vsel %vm467, %v459, %v1512
      %v1514 = vpack.c.b16 %v1513, %v1507
      %v1516 = vsel %vm701, %v1514, 0
      %1518 = vmatprep.subr.bf16.mxu0 0
      %1519 = vmatpush1.bf16.xpose.msra.mxu0 %v1311
      %1520 = vmatprep.subr.bf16.mxu0 0
      %1521 = vmatpush1.bf16.xpose.msra.mxu0 0
      %1522 = vmatprep.subr.bf16.mxu0 0
      %1523 = vmatpush1.bf16.xpose.msra.mxu0 0
      %1524 = vmatprep.subr.bf16.mxu0 0
      %1525 = vmatpush1.bf16.xpose.msra.mxu0 0
      %1526 = vmatprep.subr.bf16.mxu0 0
      %1527 = vmatpush1.bf16.xpose.msra.mxu0 0
      %1528 = vmatprep.subr.bf16.mxu0 0
      %1529 = vmatpush1.bf16.xpose.msra.mxu0 0
      %1530 = vmatprep.subr.bf16.mxu0 0
      %1531 = vmatpush1.bf16.xpose.msra.mxu0 0
      %1532 = vmatprep.subr.bf16.mxu0 0
      %1533 = vmatpush1.bf16.xpose.msra.mxu0 0
      %1534 = vmatprep.subr.bf16.mxu0 0
      %1535 = vmatpush1.bf16.xpose.msra.mxu0 0
      %1536 = vmatprep.subr.bf16.mxu0 0
      %1537 = vmatpush1.bf16.xpose.msra.mxu0 0
      %1538 = vmatprep.subr.bf16.mxu0 0
      %1539 = vmatpush1.bf16.xpose.msra.mxu0 0
      %1540 = vmatprep.subr.bf16.mxu0 0
      %1541 = vmatpush1.bf16.xpose.msra.mxu0 0
      %1542 = vmatprep.subr.bf16.mxu0 0
      %1543 = vmatpush1.bf16.xpose.msra.mxu0 0
      %1544 = vmatprep.subr.bf16.mxu0 0
      %1545 = vmatpush1.bf16.xpose.msra.mxu0 0
      %1546 = vmatprep.subr.bf16.mxu0 0
      %1547 = vmatpush1.bf16.xpose.msra.mxu0 0
      %1548 = vmatprep.subr.bf16.mxu0 0
      %1549 = vmatpush1.bf16.xpose.msra.mxu0 0
      %1550 = vmatprep.mubr.bf16.mxu0 0
      %1551 = vmatmul.mubr.bf16.gmra.mrb[0].mxu0 %v1516
      %v1552 = vpop.f32.mrb[0].mxu0
      %v1553 = vadd.f32 0.0, %v1552
      %v1554 = vpop.f32.mrb[0].mxu0
      %v1555 = vpop.f32.mrb[0].mxu0
      %v1556 = vadd.f32 0.0, %v1555
      %v1557 = vpop.f32.mrb[0].mxu0
      %1558 = vdwg.mxu0
      %v1559 = vmul.f32 %v1553, 0.25
      %v1560 = vmul.f32 %v1556, 0.25
      %s1561 = scalar_lea.vmem [#allocation2], 48
      %v1562 = vld [vmem:[%s1561] sm:$0xff]
      %v1563 = vld [vmem:[%s1561 + $0x8] sm:$0xf]
      %v1564 = vsel %vm753, %v1559, -inf
      %1565 = vmax.xlane.f32.xlu0 %v1564
      %v1566 = vpop.xlane.xlu0 %1565
      %v1567 = vsel %vm757, %v1560, -inf
      %1568 = vmax.xlane.f32.xlu0 %v1567
      %v1569 = vpop.xlane.xlu0 %1568
      %v1570 = vmax.f32 %v1562, %v1566
      %v1571 = vmax.f32 %v1563, %v1569
      %v1572 = vsub.f32 %v1562, %v1570
      %v1573 = vsub.f32 %v1563, %v1571
      %v1574 = vmul.f32 %v1572, 1.442695
      %v1575 = vpow.pop %v1574
      %v1576 = vmul.f32 %v1573, 1.442695
      %v1577 = vpow.pop %v1576
      %1579 = vset.pattern.permute.xlu0 0
      %1580 = vperm.xlu0 %1579, %v1570
      %v1581 = vpop.permute.xlu0 %1580
      %1584 = vset.pattern.permute.xlu0 0
      %1585 = vperm.xlu0 %1584, %v1571
      %v1586 = vpop.permute.xlu0 %1585
      %v1588 = vsub.f32 %v1559, %v1581
      %v1589 = vsub.f32 %v1560, %v1586
      %v1590 = vmul.f32 %v1588, 1.442695
      %v1591 = vpow.pop %v1590
      %v1592 = vmul.f32 %v1589, 1.442695
      %v1593 = vpow.pop %v1592
      %s1594 = scalar_lea.vmem [#allocation3], 48
      %v1595 = vld [vmem:[%s1594] sm:$0xff]
      %v1596 = vld [vmem:[%s1594 + $0x8] sm:$0xf]
      %v1597 = vmul.f32 %v1575, %v1595
      %v1598 = vmul.f32 %v1577, %v1596
      %v1599 = vsel %vm753, %v1591, 0.0
      %1600 = vadd.xlane.f32.xlu0 %v1599
      %v1601 = vpop.xlane.xlu0 %1600
      %v1602 = vsel %vm757, %v1593, 0.0
      %1603 = vadd.xlane.f32.xlu0 %v1602
      %v1604 = vpop.xlane.xlu0 %1603
      %v1605 = vadd.f32 %v1597, %v1601
      %v1606 = vadd.f32 %v1598, %v1604
      %1607 = vst.msk [vmem:[%s1594] sm:$0xff] %vm797, %v1605
      %1608 = vst.msk [vmem:[%s1594 + $0x8] sm:$0xf] %vm799, %v1606
      %s1609 = scalar_lea.vmem [#allocation4], 48
      %v1610 = vld [vmem:[%s1609] sm:$0xff]
      %v1611 = vld [vmem:[%s1609 + $0x8] sm:$0xf]
      %1613 = vset.pattern.permute.xlu0 0
      %1614 = vperm.xlu0 %1613, %v1575
      %v1615 = vpop.permute.xlu0 %1614
      %1618 = vset.pattern.permute.xlu0 0
      %1619 = vperm.xlu0 %1618, %v1577
      %v1620 = vpop.permute.xlu0 %1619
      %v1622 = vmul.f32 %v1615, %v1610
      %v1623 = vmul.f32 %v1620, %v1611
      %v1624 = vpack.c.bf16 %v1593, %v1591
      %v1626 = vsel %vm753, %v1624, 0
      %1628 = vmatprep.subr.bf16.mxu0 0
      %1629 = vmatpush1.bf16.msra.mxu0 %v1445
      %1630 = vmatprep.subr.bf16.mxu0 0
      %1631 = vmatpush1.bf16.msra.mxu0 0
      %1632 = vmatprep.subr.bf16.mxu0 0
      %1633 = vmatpush1.bf16.msra.mxu0 0
      %1634 = vmatprep.subr.bf16.mxu0 0
      %1635 = vmatpush1.bf16.msra.mxu0 0
      %1636 = vmatprep.subr.bf16.mxu0 0
      %1637 = vmatpush1.bf16.msra.mxu0 0
      %1638 = vmatprep.subr.bf16.mxu0 0
      %1639 = vmatpush1.bf16.msra.mxu0 0
      %1640 = vmatprep.subr.bf16.mxu0 0
      %1641 = vmatpush1.bf16.msra.mxu0 0
      %1642 = vmatprep.subr.bf16.mxu0 0
      %1643 = vmatpush1.bf16.msra.mxu0 0
      %1644 = vmatprep.subr.bf16.mxu0 0
      %1645 = vmatpush1.bf16.msra.mxu0 0
      %1646 = vmatprep.subr.bf16.mxu0 0
      %1647 = vmatpush1.bf16.msra.mxu0 0
      %1648 = vmatprep.subr.bf16.mxu0 0
      %1649 = vmatpush1.bf16.msra.mxu0 0
      %1650 = vmatprep.subr.bf16.mxu0 0
      %1651 = vmatpush1.bf16.msra.mxu0 0
      %1652 = vmatprep.subr.bf16.mxu0 0
      %1653 = vmatpush1.bf16.msra.mxu0 0
      %1654 = vmatprep.subr.bf16.mxu0 0
      %1655 = vmatpush1.bf16.msra.mxu0 0
      %1656 = vmatprep.subr.bf16.mxu0 0
      %1657 = vmatpush1.bf16.msra.mxu0 0
      %1658 = vmatprep.subr.bf16.mxu0 0
      %1659 = vmatpush1.bf16.msra.mxu0 0
      %1660 = vmatprep.mubr.bf16.mxu0 0
      %1661 = vmatmul.mubr.bf16.gmra.mrb[0].mxu0 %v1626
      %v1662 = vpop.f32.mrb[0].mxu0
      %v1663 = vadd.f32 0.0, %v1662
      %v1664 = vpop.f32.mrb[0].mxu0
      %v1665 = vpop.f32.mrb[0].mxu0
      %v1666 = vadd.f32 0.0, %v1665
      %v1667 = vpop.f32.mrb[0].mxu0
      %1668 = vdwg.mxu0
      %v1669 = vadd.f32 %v1622, %v1663
      %v1670 = vadd.f32 %v1623, %v1666
      %1671 = vst.msk [vmem:[%s1609] sm:$0xff] %vm701, %v1669
      %1672 = vst.msk [vmem:[%s1609 + $0x8] sm:$0xf] %vm1080, %v1670
      %1673 = vst.msk [vmem:[%s1561] sm:$0xff] %vm797, %v1570
      %1674 = vst.msk [vmem:[%s1561 + $0x8] sm:$0xf] %vm799, %v1571
      // Predicated region
      $region37: #{attention_forward.4} parent=31 // pred_check
        %p1675 = pneg %p284
      $region38: #{attention_forward.4} parent=31 // pred_check_branch
        %1677 = sbr.rel (%p1675) target = $region40
      $region39: #{attention_forward.4} parent=31 // pred_region
        %v1678 = vld [vmem:[#allocation3] sm:$0xff]
        %v1679 = vld [vmem:[#allocation3 + $0x8] sm:$0xf]
        %v1680 = vrcp.pop %v1678
        %v1681 = vrcp.pop %v1679
        %v1682 = vld [vmem:[#allocation4] sm:$0xff]
        %v1683 = vld [vmem:[#allocation4 + $0x8] sm:$0xf]
        %1685 = vset.pattern.permute.xlu0 0
        %1686 = vperm.xlu0 %1685, %v1680
        %v1687 = vpop.permute.xlu0 %1686
        %1690 = vset.pattern.permute.xlu0 0
        %1691 = vperm.xlu0 %1690, %v1681
        %v1692 = vpop.permute.xlu0 %1691
        %v1694 = vmul.f32 %v1682, %v1687
        %v1695 = vmul.f32 %v1683, %v1692
        %v1696 = vpack.c.bf16 %v1695, %v1694
        %v1697 = vld [vmem:[%s1184] sm:$0xff]
        %v1698 = vld [vmem:[%s1184 + $0x8] sm:$0xf]
        %v1699 = vrcp.pop %v1697
        %v1700 = vrcp.pop %v1698
        %v1701 = vld [vmem:[%s1199] sm:$0xff]
        %v1702 = vld [vmem:[%s1199 + $0x8] sm:$0xf]
        %1704 = vset.pattern.permute.xlu0 0
        %1705 = vperm.xlu0 %1704, %v1699
        %v1706 = vpop.permute.xlu0 %1705
        %1709 = vset.pattern.permute.xlu0 0
        %1710 = vperm.xlu0 %1709, %v1700
        %v1711 = vpop.permute.xlu0 %1710
        %v1713 = vmul.f32 %v1701, %v1706
        %v1714 = vmul.f32 %v1702, %v1711
        %v1715 = vpack.c.bf16 %v1714, %v1713
        %v1716 = vld [vmem:[%s1389] sm:$0xff]
        %v1717 = vld [vmem:[%s1389 + $0x8] sm:$0xf]
        %v1718 = vrcp.pop %v1716
        %v1719 = vrcp.pop %v1717
        %v1720 = vld [vmem:[%s1404] sm:$0xff]
        %v1721 = vld [vmem:[%s1404 + $0x8] sm:$0xf]
        %1723 = vset.pattern.permute.xlu0 0
        %1724 = vperm.xlu0 %1723, %v1718
        %v1725 = vpop.permute.xlu0 %1724
        %1728 = vset.pattern.permute.xlu0 0
        %1729 = vperm.xlu0 %1728, %v1719
        %v1730 = vpop.permute.xlu0 %1729
        %v1732 = vmul.f32 %v1720, %v1725
        %v1733 = vmul.f32 %v1721, %v1730
        %v1734 = vpack.c.bf16 %v1733, %v1732
        %v1735 = vld [vmem:[%s1594] sm:$0xff]
        %v1736 = vld [vmem:[%s1594 + $0x8] sm:$0xf]
        %v1737 = vrcp.pop %v1735
        %v1738 = vrcp.pop %v1736
        %v1739 = vld [vmem:[%s1609] sm:$0xff]
        %v1740 = vld [vmem:[%s1609 + $0x8] sm:$0xf]
        %1742 = vset.pattern.permute.xlu0 0
        %1743 = vperm.xlu0 %1742, %v1737
        %v1744 = vpop.permute.xlu0 %1743
        %1747 = vset.pattern.permute.xlu0 0
        %1748 = vperm.xlu0 %1747, %v1738
        %v1749 = vpop.permute.xlu0 %1748
        %v1751 = vmul.f32 %v1739, %v1744
        %v1752 = vmul.f32 %v1740, %v1749
        %v1753 = vpack.c.bf16 %v1752, %v1751
        %1755 = vrot.lane.b32.xlu0 %v1715, 16
        %v1756 = vpop.permute.xlu0 %1755
        %1758 = vrot.lane.b32.xlu0 %v1734, 32
        %v1759 = vpop.permute.xlu0 %1758
        %1761 = vrot.lane.b32.xlu0 %v1753, 48
        %v1762 = vpop.permute.xlu0 %1761
        %v1765 = vsel %vm701, %v1696, %v1756
        %vm1766 = vcmask 261120
        %v1768 = vsel %vm1766, %v1765, %v1759
        %vm1769 = vcmask 392192
        %v1771 = vsel %vm1769, %v1768, %v1762
        %v1773 = vunpack.c.l.b16 %v1771
        %v1774 = vunpack.c.h.b16 %v1771
        %v1775 = vpack.c.b16 %v1773, %v1773
        %v1776 = vpack.c.b16 %v1774, %v1774
        %vm1779 = vcmask 519168
        %1780 = vst.msk [vmem:[%s281] sm:$0xf] %vm1779, %v1775
        %vm1781 = vcmask 517120
        %1782 = vst.msk [vmem:[%s281 + $0x4] sm:$0x3] %vm1781, %v1776
      $region40: #{attention_forward.4} parent=31 // pred_fallthru
        _
      %s1783 = smul.u32 2, %s20
      %p1784 = scmp.lt.s32.totalorder %s19, 1
      %s1785 = scalar_select %p1784, %s19, 1
      %p1786 = scmp.lt.s32.totalorder %s1783, 1
      %s1787 = scalar_select %p1786, %s1783, 1
      %s1788 = smul.addr %s1785, 2
      %s1789 = sadd.s32 %s1787, %s1788
      %s1790 = smul.addr %s1789, 4
      %s1791 = scalar_lea.vmem %s3, %s1790
      // Predicated region
      $region41: #{attention_forward.4} parent=31 // pred_check
        %p1792 = pneg %p137
      $region42: #{attention_forward.4} parent=31 // pred_check_branch
        %1794 = sbr.rel (%p1792) target = $region44
      $region43: #{attention_forward.4} parent=31 // pred_region
        %s1795 = smul.u32 2, %s20
      $region44: #{attention_forward.4} parent=31 // pred_fallthru
        _
    $region32: #{attention_forward.4} parent=5 // pred_fallthru
      _
    %p1796 = scmp.le.s32.totalorder 2, %s9
    // Predicated region
    $region45: #{attention_forward.4} parent=5 // pred_check
      %p1797 = pneg %p1796
    $region46: #{attention_forward.4} parent=5 // pred_check_branch
      %1799 = sbr.rel (%p1797) target = $region48
    $region47: #{attention_forward.4} parent=5 // pred_region
      %s1800 = ssub.s32 %s9, 2
      // Predicated region
      $region49: #{attention_forward.4} parent=47 // pred_check
        %p1801 = pneg %p143
      $region50: #{attention_forward.4} parent=47 // pred_check_branch
        %1803 = sbr.rel (%p1801) target = $region52
      $region51: #{attention_forward.4} parent=47 // pred_region
        %s1804 = smul.u32 2, %s23
        %p1805 = scmp.lt.s32.totalorder %s22, 1
        %s1806 = scalar_select %p1805, %s22, 1
        %p1807 = scmp.lt.s32.totalorder %s1804, 1
        %s1808 = scalar_select %p1807, %s1804, 1
        %s1809 = smul.addr %s1806, 2
        %s1810 = sadd.s32 %s1808, %s1809
        %s1811 = smul.addr %s1810, 4
        %s1812 = scalar_lea.vmem %s3, %s1811
      $region52: #{attention_forward.4} parent=47 // pred_fallthru
        _
    $region48: #{attention_forward.4} parent=5 // pred_fallthru
      _
  $region6: #{attention_forward.4} parent=0 // loop_footer
    %s13 = sadd.s32 1, %s9
  $region7: #{attention_forward.4} parent=0 // loop_footer_branch
    %8 = sbr.rel target = $region3
  $region8: #{attention_forward.4} parent=0 // loop_exit
    _

</llo_original>
